<compile_context>
chip_gen: v6e
topology: v6e:2x2x1
jax: 0.10.0
libtpu: 0.0.40
codegen_flags: <defaults>
</compile_context>

<pallas_src>
import functools

import numpy as np
import jax
import jax.numpy as jnp
from jax.experimental import pallas as pl
from jax.experimental.pallas import tpu as pltpu

Z_PAD = 128    # latent padded to one full 128-lane half -> lane-dense stats store


# --------------------- jigsaw shuffle as ONE precomputed gather ---------------------
def build_jigsaw_index_map(n, c, h, w, num=4, seed=0):
    """Fold (block permutation + per-output-block rot90) into a flat gather index.

    Returns int32 (n, c*h*w): out_flat[b, k] = in_flat[b, idx[b, k]] reproduces
    shuffle(im, num, rotate=True) applied independently per image in NCHW layout.
    Deterministic (fixed NumPy seed) -- matches the reference semantics, not its
    RNG stream.  Rebuild with a fresh seed per call to redraw the shuffle.
    """
    rng = np.random.RandomState(seed)
    blk = h // num
    bh, bw = np.meshgrid(np.arange(blk), np.arange(blk), indexing="ij")
    idx = np.empty((n, c * h * w), dtype=np.int32)
    for b in range(n):
        perm = rng.permutation(num * num)
        src_h = np.empty((h, w), dtype=np.int32)
        src_w = np.empty((h, w), dtype=np.int32)
        for i in range(num):
            for j in range(num):
                src = int(perm[i * num + j])
                rot = int(rng.randint(0, 4))          # per-output-block rotation
                si, sj = src // num, src % num
                if rot == 0:
                    sbh, sbw = bh, bw
                elif rot == 1:                         # out[p,q] = in[q, blk-1-p]
                    sbh, sbw = bw, blk - 1 - bh
                elif rot == 2:                         # out[p,q] = in[blk-1-p, blk-1-q]
                    sbh, sbw = blk - 1 - bh, blk - 1 - bw
                else:                                  # out[p,q] = in[blk-1-q, p]
                    sbh, sbw = blk - 1 - bw, bh
                src_h[i * blk:(i + 1) * blk, j * blk:(j + 1) * blk] = si * blk + sbh
                src_w[i * blk:(i + 1) * blk, j * blk:(j + 1) * blk] = sj * blk + sbw
        chan = np.arange(c)[:, None, None]
        flat = chan * (h * w) + src_h[None] * w + src_w[None]   # NCHW flat index
        idx[b] = flat.reshape(-1)
    return idx


# ------------------------------- Pallas kernel (hot path) ----------------------------
def vae_kernel(x_ref, eps_ref,
               w1_ref, b1_ref, w2_ref, b2_ref,
               wst_ref, bst_ref,
               wd1_ref, bd1_ref, wd2_ref, bd2_ref,
               wout_ref, bout_ref,
               recon_ref, stats_ref):
    f32 = jnp.float32
    bf16 = jnp.bfloat16

    # --- encoder MLP (bf16 MXU operands, f32 accumulation; elementwise in f32) ---
    h = jnp.dot(x_ref[...], w1_ref[...], preferred_element_type=f32) + b1_ref[...]
    h = jnp.maximum(h, 0.0)
    h = jnp.dot(h.astype(bf16), w2_ref[...], preferred_element_type=f32) + b2_ref[...]
    h = jnp.maximum(h, 0.0)

    # --- bottleneck: fused [mu | logvar] matmul, lane-dense (TILE_M, 2*Z_PAD) store ---
    stats = jnp.dot(h.astype(bf16), wst_ref[...], preferred_element_type=f32) + bst_ref[...]
    stats_ref[...] = stats
    zp = stats.shape[-1] // 2
    mu = stats[:, :zp]                    # slices land on 128-lane vreg boundaries
    lv = stats[:, zp:]
    z = mu + eps_ref[...] * jnp.exp(0.5 * lv)   # reparameterization (f32)

    # --- decoder MLP ---
    d = jnp.dot(z.astype(bf16), wd1_ref[...], preferred_element_type=f32) + bd1_ref[...]
    d = jnp.maximum(d, 0.0)
    d = jnp.dot(d.astype(bf16), wd2_ref[...], preferred_element_type=f32) + bd2_ref[...]
    d = jnp.maximum(d, 0.0)
    logits = jnp.dot(d.astype(bf16), wout_ref[...], preferred_element_type=f32) + bout_ref[...]
    # bf16 store: halves the dominant HBM writeback (kernel is memory-bound here).
    recon_ref[...] = jax.nn.sigmoid(logits).astype(recon_ref.dtype)


# ------------------------------- tile-size selection ---------------------------------
def _pick_tile_m(n):
    """16-row (bf16 sublane) granularity.

    Tiny batches -> a single minimally padded tile (no 128-row padding waste).
    Bigger batches -> ~half-batch tiles capped at 512 rows: amortizes the
    ~0.35 us/step grid overhead while keeping >=2 grid steps so v7x's two
    TensorCores both get work under dimension_semantics=("parallel",).
    """
    n16 = -(-n // 16) * 16
    if n16 <= 32:
        return n16
    return min(512, -(-(n16 // 2) // 16) * 16)


# -------------------------------------- wrapper --------------------------------------
@functools.partial(jax.jit, static_argnames=("z_dim",))
def jigsaw_vae_forward(x, packed, eps, idx, *, z_dim):
    """x: (N, nc, H, W) f32; returns (recon NCHW f32, mu, log_var).

    Fully jitted: the jigsaw gather, batch padding, bf16 cast, the Pallas call and
    the output slice/reshape/upcast fuse into a single XLA program (one dispatch).
    """
    N, nc, H, W = x.shape
    d_in = nc * H * W
    hidden = packed["w1"].shape[1]
    d_out = packed["wout"].shape[1]
    target_size = int(round((d_out // nc) ** 0.5))
    assert nc * target_size * target_size == d_out, "wout columns must equal nc*target^2"
    assert d_in % 128 == 0 and d_out % 128 == 0, "keep feature dims lane-dense (x128)"

    # 1) jigsaw shuffle: a single gather on the flattened NCHW features.
    x_flat = x.reshape(N, d_in)
    x_shuf = jnp.take_along_axis(x_flat, idx, axis=1)

    # 2) pad batch to a multiple of tile_m; pad eps to Z_PAD lanes (fused under jit).
    tile_m = _pick_tile_m(N)
    n_pad = pl.cdiv(N, tile_m) * tile_m
    x_p = jnp.zeros((n_pad, d_in), jnp.bfloat16).at[:N].set(x_shuf.astype(jnp.bfloat16))
    eps_p = jnp.zeros((n_pad, Z_PAD), jnp.float32).at[:N, :z_dim].set(eps)

    grid = (n_pad // tile_m,)
    row = lambda cols: pl.BlockSpec((tile_m, cols), lambda i: (i, 0))     # batch-tiled
    # Constant index_map -> fetched once, VMEM-resident across grid steps.
    res = lambda a: pl.BlockSpec(a.shape, lambda i: (0, 0))

    operands = (
        x_p, eps_p,
        packed["w1"], packed["b1"], packed["w2"], packed["b2"],
        packed["wst"], packed["bst"],
        packed["wd1"], packed["bd1"], packed["wd2"], packed["bd2"],
        packed["wout"], packed["bout"],
    )
    in_specs = [row(d_in), row(Z_PAD)] + [res(a) for a in operands[2:]]

    # Advisory cost estimate so XLA schedules the surrounding fused ops correctly.
    weight_bytes = sum(int(a.size) * a.dtype.itemsize for a in operands[2:])
    cost = pl.CostEstimate(
        flops=2 * n_pad * (d_in * hidden + hidden * hidden + hidden * 2 * Z_PAD
                           + Z_PAD * hidden + hidden * hidden + hidden * d_out),
        transcendentals=n_pad * (Z_PAD + d_out),          # reparam exp + sigmoid
        bytes_accessed=(n_pad * d_in * 2 + n_pad * Z_PAD * 4 + weight_bytes
                        + n_pad * d_out * 2 + n_pad * 2 * Z_PAD * 4),
    )

    recon_p, stats_p = pl.pallas_call(
        vae_kernel,
        grid=grid,
        in_specs=in_specs,
        out_specs=(row(d_out), row(2 * Z_PAD)),
        out_shape=(
            jax.ShapeDtypeStruct((n_pad, d_out), jnp.bfloat16),   # bf16 recon writeback
            jax.ShapeDtypeStruct((n_pad, 2 * Z_PAD), jnp.float32),
        ),
        compiler_params=pltpu.CompilerParams(
            dimension_semantics=("parallel",),      # shard batch tiles across TCs (v7x)
            vmem_limit_bytes=48 * 1024 * 1024,      # stay under v7x's 64 MiB VMEM
        ),
        cost_estimate=cost,
    )(*operands)

    recon = recon_p[:N].astype(jnp.float32).reshape(N, nc, target_size, target_size)
    mu = stats_p[:N, :z_dim]
    log_var = stats_p[:N, Z_PAD:Z_PAD + z_dim]
    return recon, mu, log_var


# ------------------------- deterministic parameter init / packing --------------------
def init_params(key, nc, spatial, z_dim, hidden, target_size):
    d_in = nc * spatial * spatial
    d_out = nc * target_size * target_size
    keys = jax.random.split(key, 14)

    def lin(kw, kb, fan_in, fan_out):
        s = 1.0 / np.sqrt(fan_in)
        w = jax.random.uniform(kw, (fan_in, fan_out), jnp.float32, -s, s)
        b = jax.random.uniform(kb, (1, fan_out), jnp.float32, -s, s)
        return w, b

    p = {}
    p["w1"], p["b1"] = lin(keys[0], keys[1], d_in, hidden)
    p["w2"], p["b2"] = lin(keys[2], keys[3], hidden, hidden)
    p["wmu"], p["bmu"] = lin(keys[4], keys[5], hidden, z_dim)
    p["wlv"], p["blv"] = lin(keys[6], keys[7], hidden, z_dim)
    p["wd1"], p["bd1"] = lin(keys[8], keys[9], z_dim, hidden)
    p["wd2"], p["bd2"] = lin(keys[10], keys[11], hidden, hidden)
    p["wout"], p["bout"] = lin(keys[12], keys[13], hidden, d_out)
    return p


def pack_params(p, z_dim):
    """bf16 MXU weights, f32 biases; mu/logvar fused and padded into 128-lane halves."""
    hidden = p["w1"].shape[1]
    bf16 = jnp.bfloat16

    wst = jnp.zeros((hidden, 2 * Z_PAD), jnp.float32)
    wst = wst.at[:, :z_dim].set(p["wmu"]).at[:, Z_PAD:Z_PAD + z_dim].set(p["wlv"])
    bst = jnp.zeros((1, 2 * Z_PAD), jnp.float32)
    bst = bst.at[:, :z_dim].set(p["bmu"]).at[:, Z_PAD:Z_PAD + z_dim].set(p["blv"])
    wd1 = jnp.zeros((Z_PAD, hidden), jnp.float32).at[:z_dim].set(p["wd1"])

    return {
        "w1": p["w1"].astype(bf16), "b1": p["b1"],
        "w2": p["w2"].astype(bf16), "b2": p["b2"],
        "wst": wst.astype(bf16), "bst": bst,
        "wd1": wd1.astype(bf16), "bd1": p["bd1"],
        "wd2": p["wd2"].astype(bf16), "bd2": p["bd2"],
        "wout": p["wout"].astype(bf16), "bout": p["bout"],
    }


if __name__ == "__main__":
    # Small shapes consistent with the module: NCHW, 3 channels (shuffle assumes RGB).
    batch, nc, spatial = 2, 3, 16
    z_dim, hidden, target_size = 32, 256, 16     # hidden=256 fills the 256-wide MXU

    key = jax.random.PRNGKey(0)
    k_x, k_eps, k_p = jax.random.split(key, 3)

    x = jax.random.uniform(k_x, (batch, nc, spatial, spatial), jnp.float32)
    eps = jax.random.normal(k_eps, (batch, z_dim), jnp.float32)
    params = pack_params(init_params(k_p, nc, spatial, z_dim, hidden, target_size), z_dim)
    # Rebuild idx with a fresh seed per call to redraw the jigsaw shuffle (as the
    # PyTorch reference does per forward); one deterministic draw suffices here.
    idx = jnp.asarray(build_jigsaw_index_map(batch, nc, spatial, spatial, num=4, seed=0))

    recon, mu, log_var = jigsaw_vae_forward(x, params, eps, idx, z_dim=z_dim)
    jax.block_until_ready((recon, mu, log_var))

    assert recon.shape == (batch, nc, target_size, target_size)
    assert mu.shape == (batch, z_dim)
    assert log_var.shape == (batch, z_dim)
    assert bool(jnp.all(jnp.isfinite(recon)))
    assert bool(jnp.all((recon >= 0.0) & (recon <= 1.0)))
    print("KERNEL_OK")
</pallas_src>

<mosaic_0001>
module attributes {stable_mosaic.version = 11 : i64} {
  func.func @vae_kernel(%arg0: i32, %arg1: memref<16x768xbf16, #tpu.memory_space<vmem>>, %arg2: memref<16x128xf32, #tpu.memory_space<vmem>>, %arg3: memref<768x256xbf16, #tpu.memory_space<vmem>>, %arg4: memref<1x256xf32, #tpu.memory_space<vmem>>, %arg5: memref<256x256xbf16, #tpu.memory_space<vmem>>, %arg6: memref<1x256xf32, #tpu.memory_space<vmem>>, %arg7: memref<256x256xbf16, #tpu.memory_space<vmem>>, %arg8: memref<1x256xf32, #tpu.memory_space<vmem>>, %arg9: memref<128x256xbf16, #tpu.memory_space<vmem>>, %arg10: memref<1x256xf32, #tpu.memory_space<vmem>>, %arg11: memref<256x256xbf16, #tpu.memory_space<vmem>>, %arg12: memref<1x256xf32, #tpu.memory_space<vmem>>, %arg13: memref<256x768xbf16, #tpu.memory_space<vmem>>, %arg14: memref<1x768xf32, #tpu.memory_space<vmem>>, %arg15: memref<16x768xbf16, #tpu.memory_space<vmem>>, %arg16: memref<16x256xf32, #tpu.memory_space<vmem>>) attributes {dimension_semantics = [#tpu.dimension_semantics<parallel>], iteration_bounds = array<i64: 1>, scalar_prefetch = 0 : i64, scratch_operands = 0 : i64, tpu.core_type = #tpu.core_type<tc>, window_params = [{transform_indices = @transform_0, window_bounds = array<i64: 16, 768>}, {transform_indices = @transform_1, window_bounds = array<i64: 16, 128>}, {pipeline_mode = #tpu.pipeline_mode<synchronous>, transform_indices = @transform_2, window_bounds = array<i64: 768, 256>}, {pipeline_mode = #tpu.pipeline_mode<synchronous>, transform_indices = @transform_3, window_bounds = array<i64: 1, 256>}, {pipeline_mode = #tpu.pipeline_mode<synchronous>, transform_indices = @transform_4, window_bounds = array<i64: 256, 256>}, {pipeline_mode = #tpu.pipeline_mode<synchronous>, transform_indices = @transform_5, window_bounds = array<i64: 1, 256>}, {pipeline_mode = #tpu.pipeline_mode<synchronous>, transform_indices = @transform_6, window_bounds = array<i64: 256, 256>}, {pipeline_mode = #tpu.pipeline_mode<synchronous>, transform_indices = @transform_7, window_bounds = array<i64: 1, 256>}, {pipeline_mode = #tpu.pipeline_mode<synchronous>, transform_indices = @transform_8, window_bounds = array<i64: 128, 256>}, {pipeline_mode = #tpu.pipeline_mode<synchronous>, transform_indices = @transform_9, window_bounds = array<i64: 1, 256>}, {pipeline_mode = #tpu.pipeline_mode<synchronous>, transform_indices = @transform_10, window_bounds = array<i64: 256, 256>}, {pipeline_mode = #tpu.pipeline_mode<synchronous>, transform_indices = @transform_11, window_bounds = array<i64: 1, 256>}, {pipeline_mode = #tpu.pipeline_mode<synchronous>, transform_indices = @transform_12, window_bounds = array<i64: 256, 768>}, {pipeline_mode = #tpu.pipeline_mode<synchronous>, transform_indices = @transform_13, window_bounds = array<i64: 1, 768>}, {transform_indices = @transform_14, window_bounds = array<i64: 16, 768>}, {transform_indices = @transform_15, window_bounds = array<i64: 16, 256>}]} {
    %c0 = arith.constant 0 : index
    %c0_0 = arith.constant 0 : index
    %0 = vector.load %arg1[%c0, %c0_0] : memref<16x768xbf16, #tpu.memory_space<vmem>>, vector<16x768xbf16>
    %c0_1 = arith.constant 0 : index
    %c0_2 = arith.constant 0 : index
    %1 = vector.load %arg3[%c0_1, %c0_2] : memref<768x256xbf16, #tpu.memory_space<vmem>>, vector<768x256xbf16>
    %cst = arith.constant dense<0.000000e+00> : vector<16x256xf32>
    %2 = tpu.matmul %0, %1, %cst {dimension_numbers = #tpu.dot_dimension_numbers<[1], [0], [0], [1], [0, 0, 1, 1], [], []>} : vector<16x768xbf16>, vector<768x256xbf16>, vector<16x256xf32> -> vector<16x256xf32>
    %c0_3 = arith.constant 0 : index
    %c0_4 = arith.constant 0 : index
    %3 = vector.load %arg4[%c0_3, %c0_4] : memref<1x256xf32, #tpu.memory_space<vmem>>, vector<1x256xf32>
    %4 = vector.broadcast %3 : vector<1x256xf32> to vector<16x256xf32>
    %5 = arith.addf %2, %4 : vector<16x256xf32>
    %cst_5 = arith.constant 0.000000e+00 : f32
    %6 = vector.broadcast %cst_5 : f32 to vector<16x256xf32>
    %7 = arith.maximumf %5, %6 : vector<16x256xf32>
    %8 = arith.truncf %7 : vector<16x256xf32> to vector<16x256xbf16>
    %c0_6 = arith.constant 0 : index
    %c0_7 = arith.constant 0 : index
    %9 = vector.load %arg5[%c0_6, %c0_7] : memref<256x256xbf16, #tpu.memory_space<vmem>>, vector<256x256xbf16>
    %cst_8 = arith.constant dense<0.000000e+00> : vector<16x256xf32>
    %10 = tpu.matmul %8, %9, %cst_8 {dimension_numbers = #tpu.dot_dimension_numbers<[1], [0], [0], [1], [0, 0, 1, 1], [], []>} : vector<16x256xbf16>, vector<256x256xbf16>, vector<16x256xf32> -> vector<16x256xf32>
    %c0_9 = arith.constant 0 : index
    %c0_10 = arith.constant 0 : index
    %11 = vector.load %arg6[%c0_9, %c0_10] : memref<1x256xf32, #tpu.memory_space<vmem>>, vector<1x256xf32>
    %12 = vector.broadcast %11 : vector<1x256xf32> to vector<16x256xf32>
    %13 = arith.addf %10, %12 : vector<16x256xf32>
    %cst_11 = arith.constant 0.000000e+00 : f32
    %14 = vector.broadcast %cst_11 : f32 to vector<16x256xf32>
    %15 = arith.maximumf %13, %14 : vector<16x256xf32>
    %16 = arith.truncf %15 : vector<16x256xf32> to vector<16x256xbf16>
    %c0_12 = arith.constant 0 : index
    %c0_13 = arith.constant 0 : index
    %17 = vector.load %arg7[%c0_12, %c0_13] : memref<256x256xbf16, #tpu.memory_space<vmem>>, vector<256x256xbf16>
    %cst_14 = arith.constant dense<0.000000e+00> : vector<16x256xf32>
    %18 = tpu.matmul %16, %17, %cst_14 {dimension_numbers = #tpu.dot_dimension_numbers<[1], [0], [0], [1], [0, 0, 1, 1], [], []>} : vector<16x256xbf16>, vector<256x256xbf16>, vector<16x256xf32> -> vector<16x256xf32>
    %c0_15 = arith.constant 0 : index
    %c0_16 = arith.constant 0 : index
    %19 = vector.load %arg8[%c0_15, %c0_16] : memref<1x256xf32, #tpu.memory_space<vmem>>, vector<1x256xf32>
    %20 = vector.broadcast %19 : vector<1x256xf32> to vector<16x256xf32>
    %21 = arith.addf %18, %20 : vector<16x256xf32>
    %c0_17 = arith.constant 0 : index
    %c0_18 = arith.constant 0 : index
    %22 = vector.load %arg16[%c0_17, %c0_18] : memref<16x256xf32, #tpu.memory_space<vmem>>, vector<16x256xf32>
    tpu.vector_store %arg16[%c0_17, %c0_18], %21 {strides = array<i32>} : memref<16x256xf32, #tpu.memory_space<vmem>>, vector<16x256xf32>,
    %23 = vector.extract_strided_slice %21 {offsets = [0, 0], sizes = [16, 128], strides = [1, 1]} : vector<16x256xf32> to vector<16x128xf32>
    %24 = vector.extract_strided_slice %21 {offsets = [0, 128], sizes = [16, 128], strides = [1, 1]} : vector<16x256xf32> to vector<16x128xf32>
    %c0_19 = arith.constant 0 : index
    %c0_20 = arith.constant 0 : index
    %25 = vector.load %arg2[%c0_19, %c0_20] : memref<16x128xf32, #tpu.memory_space<vmem>>, vector<16x128xf32>
    %cst_21 = arith.constant 5.000000e-01 : f32
    %26 = vector.broadcast %cst_21 : f32 to vector<16x128xf32>
    %27 = arith.mulf %26, %24 : vector<16x128xf32>
    %28 = math.exp %27 : vector<16x128xf32>
    %29 = arith.mulf %25, %28 : vector<16x128xf32>
    %30 = arith.addf %23, %29 : vector<16x128xf32>
    %31 = arith.truncf %30 : vector<16x128xf32> to vector<16x128xbf16>
    %c0_22 = arith.constant 0 : index
    %c0_23 = arith.constant 0 : index
    %32 = vector.load %arg9[%c0_22, %c0_23] : memref<128x256xbf16, #tpu.memory_space<vmem>>, vector<128x256xbf16>
    %cst_24 = arith.constant dense<0.000000e+00> : vector<16x256xf32>
    %33 = tpu.matmul %31, %32, %cst_24 {dimension_numbers = #tpu.dot_dimension_numbers<[1], [0], [0], [1], [0, 0, 1, 1], [], []>} : vector<16x128xbf16>, vector<128x256xbf16>, vector<16x256xf32> -> vector<16x256xf32>
    %c0_25 = arith.constant 0 : index
    %c0_26 = arith.constant 0 : index
    %34 = vector.load %arg10[%c0_25, %c0_26] : memref<1x256xf32, #tpu.memory_space<vmem>>, vector<1x256xf32>
    %35 = vector.broadcast %34 : vector<1x256xf32> to vector<16x256xf32>
    %36 = arith.addf %33, %35 : vector<16x256xf32>
    %cst_27 = arith.constant 0.000000e+00 : f32
    %37 = vector.broadcast %cst_27 : f32 to vector<16x256xf32>
    %38 = arith.maximumf %36, %37 : vector<16x256xf32>
    %39 = arith.truncf %38 : vector<16x256xf32> to vector<16x256xbf16>
    %c0_28 = arith.constant 0 : index
    %c0_29 = arith.constant 0 : index
    %40 = vector.load %arg11[%c0_28, %c0_29] : memref<256x256xbf16, #tpu.memory_space<vmem>>, vector<256x256xbf16>
    %cst_30 = arith.constant dense<0.000000e+00> : vector<16x256xf32>
    %41 = tpu.matmul %39, %40, %cst_30 {dimension_numbers = #tpu.dot_dimension_numbers<[1], [0], [0], [1], [0, 0, 1, 1], [], []>} : vector<16x256xbf16>, vector<256x256xbf16>, vector<16x256xf32> -> vector<16x256xf32>
    %c0_31 = arith.constant 0 : index
    %c0_32 = arith.constant 0 : index
    %42 = vector.load %arg12[%c0_31, %c0_32] : memref<1x256xf32, #tpu.memory_space<vmem>>, vector<1x256xf32>
    %43 = vector.broadcast %42 : vector<1x256xf32> to vector<16x256xf32>
    %44 = arith.addf %41, %43 : vector<16x256xf32>
    %cst_33 = arith.constant 0.000000e+00 : f32
    %45 = vector.broadcast %cst_33 : f32 to vector<16x256xf32>
    %46 = arith.maximumf %44, %45 : vector<16x256xf32>
    %47 = arith.truncf %46 : vector<16x256xf32> to vector<16x256xbf16>
    %c0_34 = arith.constant 0 : index
    %c0_35 = arith.constant 0 : index
    %48 = vector.load %arg13[%c0_34, %c0_35] : memref<256x768xbf16, #tpu.memory_space<vmem>>, vector<256x768xbf16>
    %cst_36 = arith.constant dense<0.000000e+00> : vector<16x768xf32>
    %49 = tpu.matmul %47, %48, %cst_36 {dimension_numbers = #tpu.dot_dimension_numbers<[1], [0], [0], [1], [0, 0, 1, 1], [], []>} : vector<16x256xbf16>, vector<256x768xbf16>, vector<16x768xf32> -> vector<16x768xf32>
    %c0_37 = arith.constant 0 : index
    %c0_38 = arith.constant 0 : index
    %50 = vector.load %arg14[%c0_37, %c0_38] : memref<1x768xf32, #tpu.memory_space<vmem>>, vector<1x768xf32>
    %51 = vector.broadcast %50 : vector<1x768xf32> to vector<16x768xf32>
    %52 = arith.addf %49, %51 : vector<16x768xf32>
    %53 = arith.negf %52 : vector<16x768xf32>
    %54 = math.exp %53 : vector<16x768xf32>
    %cst_39 = arith.constant 1.000000e+00 : f32
    %55 = vector.broadcast %cst_39 : f32 to vector<16x768xf32>
    %56 = arith.addf %55, %54 : vector<16x768xf32>
    %57 = arith.divf %55, %56 : vector<16x768xf32>
    %58 = arith.truncf %57 : vector<16x768xf32> to vector<16x768xbf16>
    %c0_40 = arith.constant 0 : index
    %c0_41 = arith.constant 0 : index
    %59 = vector.load %arg15[%c0_40, %c0_41] : memref<16x768xbf16, #tpu.memory_space<vmem>>, vector<16x768xbf16>
    tpu.vector_store %arg15[%c0_40, %c0_41], %58 {strides = array<i32>} : memref<16x768xbf16, #tpu.memory_space<vmem>>, vector<16x768xbf16>,
    return
  }
  func.func @transform_0(%arg0: i32) -> (i32, i32) {
    %c0_i32 = arith.constant 0 : i32
    %c0_i32_0 = arith.constant 0 : i32
    return %arg0, %c0_i32 : i32, i32
  }
  func.func @transform_1(%arg0: i32) -> (i32, i32) {
    %c0_i32 = arith.constant 0 : i32
    %c0_i32_0 = arith.constant 0 : i32
    return %arg0, %c0_i32 : i32, i32
  }
  func.func @transform_2(%arg0: i32) -> (i32, i32) {
    %c0_i32 = arith.constant 0 : i32
    %c0_i32_0 = arith.constant 0 : i32
    %c0_i32_1 = arith.constant 0 : i32
    return %c0_i32, %c0_i32_0 : i32, i32
  }
  func.func @transform_3(%arg0: i32) -> (i32, i32) {
    %c0_i32 = arith.constant 0 : i32
    %c0_i32_0 = arith.constant 0 : i32
    %c0_i32_1 = arith.constant 0 : i32
    return %c0_i32, %c0_i32_0 : i32, i32
  }
  func.func @transform_4(%arg0: i32) -> (i32, i32) {
    %c0_i32 = arith.constant 0 : i32
    %c0_i32_0 = arith.constant 0 : i32
    %c0_i32_1 = arith.constant 0 : i32
    return %c0_i32, %c0_i32_0 : i32, i32
  }
  func.func @transform_5(%arg0: i32) -> (i32, i32) {
    %c0_i32 = arith.constant 0 : i32
    %c0_i32_0 = arith.constant 0 : i32
    %c0_i32_1 = arith.constant 0 : i32
    return %c0_i32, %c0_i32_0 : i32, i32
  }
  func.func @transform_6(%arg0: i32) -> (i32, i32) {
    %c0_i32 = arith.constant 0 : i32
    %c0_i32_0 = arith.constant 0 : i32
    %c0_i32_1 = arith.constant 0 : i32
    return %c0_i32, %c0_i32_0 : i32, i32
  }
  func.func @transform_7(%arg0: i32) -> (i32, i32) {
    %c0_i32 = arith.constant 0 : i32
    %c0_i32_0 = arith.constant 0 : i32
    %c0_i32_1 = arith.constant 0 : i32
    return %c0_i32, %c0_i32_0 : i32, i32
  }
  func.func @transform_8(%arg0: i32) -> (i32, i32) {
    %c0_i32 = arith.constant 0 : i32
    %c0_i32_0 = arith.constant 0 : i32
    %c0_i32_1 = arith.constant 0 : i32
    return %c0_i32, %c0_i32_0 : i32, i32
  }
  func.func @transform_9(%arg0: i32) -> (i32, i32) {
    %c0_i32 = arith.constant 0 : i32
    %c0_i32_0 = arith.constant 0 : i32
    %c0_i32_1 = arith.constant 0 : i32
    return %c0_i32, %c0_i32_0 : i32, i32
  }
  func.func @transform_10(%arg0: i32) -> (i32, i32) {
    %c0_i32 = arith.constant 0 : i32
    %c0_i32_0 = arith.constant 0 : i32
    %c0_i32_1 = arith.constant 0 : i32
    return %c0_i32, %c0_i32_0 : i32, i32
  }
  func.func @transform_11(%arg0: i32) -> (i32, i32) {
    %c0_i32 = arith.constant 0 : i32
    %c0_i32_0 = arith.constant 0 : i32
    %c0_i32_1 = arith.constant 0 : i32
    return %c0_i32, %c0_i32_0 : i32, i32
  }
  func.func @transform_12(%arg0: i32) -> (i32, i32) {
    %c0_i32 = arith.constant 0 : i32
    %c0_i32_0 = arith.constant 0 : i32
    %c0_i32_1 = arith.constant 0 : i32
    return %c0_i32, %c0_i32_0 : i32, i32
  }
  func.func @transform_13(%arg0: i32) -> (i32, i32) {
    %c0_i32 = arith.constant 0 : i32
    %c0_i32_0 = arith.constant 0 : i32
    %c0_i32_1 = arith.constant 0 : i32
    return %c0_i32, %c0_i32_0 : i32, i32
  }
  func.func @transform_14(%arg0: i32) -> (i32, i32) {
    %c0_i32 = arith.constant 0 : i32
    %c0_i32_0 = arith.constant 0 : i32
    return %arg0, %c0_i32 : i32, i32
  }
  func.func @transform_15(%arg0: i32) -> (i32, i32) {
    %c0_i32 = arith.constant 0 : i32
    %c0_i32_0 = arith.constant 0 : i32
    return %arg0, %c0_i32 : i32, i32
  }
}

</mosaic_0001>

<llo_original>
// kernel: jigsaw_vae_forward.1
$region0: #{jigsaw_vae_forward.1}
  #allocation0 [shape = 'u32[]', space=smem, size = 0x4, offset = 0x4, fixed_abs, tag = 'smem constant byte address 0x4 - core index']
  #allocation1 [shape = 'u32[144,128]{1,0:T(1,128)}', space=vmem, size = 0x12000, scoped, tag = 'internal scratch']
  %s0 = inlined_call_operand.vmem [shape: bf16[16,768], index: 0, kind: input, shape index: {}]
  %s1 = inlined_call_operand.vmem [shape: f32[16,128], index: 1, kind: input, shape index: {}]
  %s2 = inlined_call_operand.vmem [shape: bf16[768,256], index: 2, kind: input, shape index: {}]
  %s3 = inlined_call_operand.vmem [shape: f32[1,256], index: 3, kind: input, shape index: {}]
  %s4 = inlined_call_operand.vmem [shape: bf16[256,256], index: 4, kind: input, shape index: {}]
  %s5 = inlined_call_operand.vmem [shape: f32[1,256], index: 5, kind: input, shape index: {}]
  %s6 = inlined_call_operand.vmem [shape: bf16[256,256], index: 6, kind: input, shape index: {}]
  %s7 = inlined_call_operand.vmem [shape: f32[1,256], index: 7, kind: input, shape index: {}]
  %s8 = inlined_call_operand.vmem [shape: bf16[128,256], index: 8, kind: input, shape index: {}]
  %s9 = inlined_call_operand.vmem [shape: f32[1,256], index: 9, kind: input, shape index: {}]
  %s10 = inlined_call_operand.vmem [shape: bf16[256,256], index: 10, kind: input, shape index: {}]
  %s11 = inlined_call_operand.vmem [shape: f32[1,256], index: 11, kind: input, shape index: {}]
  %s12 = inlined_call_operand.vmem [shape: bf16[256,768], index: 12, kind: input, shape index: {}]
  %s13 = inlined_call_operand.vmem [shape: f32[1,768], index: 13, kind: input, shape index: {}]
  %s14 = inlined_call_operand.vmem [shape: bf16[16,768], index: 14, kind: output, shape index: {0}]
  %s15 = inlined_call_operand.vmem [shape: f32[16,256], index: 15, kind: output, shape index: {1}]
  %16 = xla_tuple %s14, %s15
  %s17 = sld [smem:[#allocation0]]
  $region74: #{jigsaw_vae_forward.1} parent=0
    _
  %s19 = ssub.s32 1, %s17
  %s20 = scalar_select 0, %s19, %s17
  // Predicated region
  $region2: #{jigsaw_vae_forward.1} parent=0 // pred_check
    _
  $region3: #{jigsaw_vae_forward.1} parent=0 // pred_check_branch
    %22 = sbr.rel (0) target = $region5
  $region4: #{jigsaw_vae_forward.1} parent=0 // pred_region
    _
  $region5: #{jigsaw_vae_forward.1} parent=0 // pred_fallthru
    _
  // Predicated region
  $region6: #{jigsaw_vae_forward.1} parent=0 // pred_check
    _
  $region7: #{jigsaw_vae_forward.1} parent=0 // pred_check_branch
    %24 = sbr.rel (0) target = $region9
  $region8: #{jigsaw_vae_forward.1} parent=0 // pred_region
    _
  $region9: #{jigsaw_vae_forward.1} parent=0 // pred_fallthru
    _
  // Predicated region
  $region10: #{jigsaw_vae_forward.1} parent=0 // pred_check
    _
  $region11: #{jigsaw_vae_forward.1} parent=0 // pred_check_branch
    %26 = sbr.rel (0) target = $region13
  $region12: #{jigsaw_vae_forward.1} parent=0 // pred_region
    _
  $region13: #{jigsaw_vae_forward.1} parent=0 // pred_fallthru
    _
  // Predicated region
  $region14: #{jigsaw_vae_forward.1} parent=0 // pred_check
    _
  $region15: #{jigsaw_vae_forward.1} parent=0 // pred_check_branch
    %28 = sbr.rel (0) target = $region17
  $region16: #{jigsaw_vae_forward.1} parent=0 // pred_region
    _
  $region17: #{jigsaw_vae_forward.1} parent=0 // pred_fallthru
    _
  // Predicated region
  $region18: #{jigsaw_vae_forward.1} parent=0 // pred_check
    _
  $region19: #{jigsaw_vae_forward.1} parent=0 // pred_check_branch
    %30 = sbr.rel (0) target = $region21
  $region20: #{jigsaw_vae_forward.1} parent=0 // pred_region
    _
  $region21: #{jigsaw_vae_forward.1} parent=0 // pred_fallthru
    _
  // Predicated region
  $region22: #{jigsaw_vae_forward.1} parent=0 // pred_check
    _
  $region23: #{jigsaw_vae_forward.1} parent=0 // pred_check_branch
    %32 = sbr.rel (0) target = $region25
  $region24: #{jigsaw_vae_forward.1} parent=0 // pred_region
    _
  $region25: #{jigsaw_vae_forward.1} parent=0 // pred_fallthru
    _
  // Predicated region
  $region26: #{jigsaw_vae_forward.1} parent=0 // pred_check
    _
  $region27: #{jigsaw_vae_forward.1} parent=0 // pred_check_branch
    %34 = sbr.rel (0) target = $region29
  $region28: #{jigsaw_vae_forward.1} parent=0 // pred_region
    _
  $region29: #{jigsaw_vae_forward.1} parent=0 // pred_fallthru
    _
  // Predicated region
  $region30: #{jigsaw_vae_forward.1} parent=0 // pred_check
    _
  $region31: #{jigsaw_vae_forward.1} parent=0 // pred_check_branch
    %36 = sbr.rel (0) target = $region33
  $region32: #{jigsaw_vae_forward.1} parent=0 // pred_region
    _
  $region33: #{jigsaw_vae_forward.1} parent=0 // pred_fallthru
    _
  // Predicated region
  $region34: #{jigsaw_vae_forward.1} parent=0 // pred_check
    _
  $region35: #{jigsaw_vae_forward.1} parent=0 // pred_check_branch
    %38 = sbr.rel (0) target = $region37
  $region36: #{jigsaw_vae_forward.1} parent=0 // pred_region
    _
  $region37: #{jigsaw_vae_forward.1} parent=0 // pred_fallthru
    _
  // Predicated region
  $region38: #{jigsaw_vae_forward.1} parent=0 // pred_check
    _
  $region39: #{jigsaw_vae_forward.1} parent=0 // pred_check_branch
    %40 = sbr.rel (0) target = $region41
  $region40: #{jigsaw_vae_forward.1} parent=0 // pred_region
    _
  $region41: #{jigsaw_vae_forward.1} parent=0 // pred_fallthru
    _
  // Predicated region
  $region42: #{jigsaw_vae_forward.1} parent=0 // pred_check
    _
  $region43: #{jigsaw_vae_forward.1} parent=0 // pred_check_branch
    %42 = sbr.rel (0) target = $region45
  $region44: #{jigsaw_vae_forward.1} parent=0 // pred_region
    _
  $region45: #{jigsaw_vae_forward.1} parent=0 // pred_fallthru
    _
  // Predicated region
  $region46: #{jigsaw_vae_forward.1} parent=0 // pred_check
    _
  $region47: #{jigsaw_vae_forward.1} parent=0 // pred_check_branch
    %44 = sbr.rel (0) target = $region49
  $region48: #{jigsaw_vae_forward.1} parent=0 // pred_region
    _
  $region49: #{jigsaw_vae_forward.1} parent=0 // pred_fallthru
    _
  // Predicated region
  $region50: #{jigsaw_vae_forward.1} parent=0 // pred_check
    _
  $region51: #{jigsaw_vae_forward.1} parent=0 // pred_check_branch
    %46 = sbr.rel (0) target = $region53
  $region52: #{jigsaw_vae_forward.1} parent=0 // pred_region
    _
  $region53: #{jigsaw_vae_forward.1} parent=0 // pred_fallthru
    _
  // Predicated region
  $region54: #{jigsaw_vae_forward.1} parent=0 // pred_check
    _
  $region55: #{jigsaw_vae_forward.1} parent=0 // pred_check_branch
    %48 = sbr.rel (0) target = $region57
  $region56: #{jigsaw_vae_forward.1} parent=0 // pred_region
    _
  $region57: #{jigsaw_vae_forward.1} parent=0 // pred_fallthru
    _
  %v50 = vld [vmem:[%s0] sm:$0xff]
  %v51 = vld [vmem:[%s0 + $0x8] sm:$0xff]
  %v52 = vld [vmem:[%s0 + $0x10] sm:$0xff]
  %v53 = vld [vmem:[%s0 + $0x18] sm:$0xff]
  %v54 = vld [vmem:[%s0 + $0x20] sm:$0xff]
  %v55 = vld [vmem:[%s0 + $0x28] sm:$0xff]
  %v56 = vld [vmem:[%s2] sm:$0xff]
  %v57 = vld [vmem:[%s2 + $0x8] sm:$0xff]
  %v58 = vld [vmem:[%s2 + $0x10] sm:$0xff]
  %v59 = vld [vmem:[%s2 + $0x18] sm:$0xff]
  %v60 = vld [vmem:[%s2 + $0x20] sm:$0xff]
  %v61 = vld [vmem:[%s2 + $0x28] sm:$0xff]
  %v62 = vld [vmem:[%s2 + $0x30] sm:$0xff]
  %v63 = vld [vmem:[%s2 + $0x38] sm:$0xff]
  %v64 = vld [vmem:[%s2 + $0x40] sm:$0xff]
  %v65 = vld [vmem:[%s2 + $0x48] sm:$0xff]
  %v66 = vld [vmem:[%s2 + $0x50] sm:$0xff]
  %v67 = vld [vmem:[%s2 + $0x58] sm:$0xff]
  %v68 = vld [vmem:[%s2 + $0x60] sm:$0xff]
  %v69 = vld [vmem:[%s2 + $0x68] sm:$0xff]
  %v70 = vld [vmem:[%s2 + $0x70] sm:$0xff]
  %v71 = vld [vmem:[%s2 + $0x78] sm:$0xff]
  %v72 = vld [vmem:[%s2 + $0x80] sm:$0xff]
  %v73 = vld [vmem:[%s2 + $0x88] sm:$0xff]
  %v74 = vld [vmem:[%s2 + $0x90] sm:$0xff]
  %v75 = vld [vmem:[%s2 + $0x98] sm:$0xff]
  %v76 = vld [vmem:[%s2 + $0xa0] sm:$0xff]
  %v77 = vld [vmem:[%s2 + $0xa8] sm:$0xff]
  %v78 = vld [vmem:[%s2 + $0xb0] sm:$0xff]
  %v79 = vld [vmem:[%s2 + $0xb8] sm:$0xff]
  %v80 = vld [vmem:[%s2 + $0xc0] sm:$0xff]
  %v81 = vld [vmem:[%s2 + $0xc8] sm:$0xff]
  %v82 = vld [vmem:[%s2 + $0xd0] sm:$0xff]
  %v83 = vld [vmem:[%s2 + $0xd8] sm:$0xff]
  %v84 = vld [vmem:[%s2 + $0xe0] sm:$0xff]
  %v85 = vld [vmem:[%s2 + $0xe8] sm:$0xff]
  %v86 = vld [vmem:[%s2 + $0xf0] sm:$0xff]
  %v87 = vld [vmem:[%s2 + $0xf8] sm:$0xff]
  %v88 = vld [vmem:[%s2 + $0x100] sm:$0xff]
  %v89 = vld [vmem:[%s2 + $0x108] sm:$0xff]
  %v90 = vld [vmem:[%s2 + $0x110] sm:$0xff]
  %v91 = vld [vmem:[%s2 + $0x118] sm:$0xff]
  %v92 = vld [vmem:[%s2 + $0x120] sm:$0xff]
  %v93 = vld [vmem:[%s2 + $0x128] sm:$0xff]
  %v94 = vld [vmem:[%s2 + $0x130] sm:$0xff]
  %v95 = vld [vmem:[%s2 + $0x138] sm:$0xff]
  %v96 = vld [vmem:[%s2 + $0x140] sm:$0xff]
  %v97 = vld [vmem:[%s2 + $0x148] sm:$0xff]
  %v98 = vld [vmem:[%s2 + $0x150] sm:$0xff]
  %v99 = vld [vmem:[%s2 + $0x158] sm:$0xff]
  %v100 = vld [vmem:[%s2 + $0x160] sm:$0xff]
  %v101 = vld [vmem:[%s2 + $0x168] sm:$0xff]
  %v102 = vld [vmem:[%s2 + $0x170] sm:$0xff]
  %v103 = vld [vmem:[%s2 + $0x178] sm:$0xff]
  %v104 = vld [vmem:[%s2 + $0x180] sm:$0xff]
  %v105 = vld [vmem:[%s2 + $0x188] sm:$0xff]
  %v106 = vld [vmem:[%s2 + $0x190] sm:$0xff]
  %v107 = vld [vmem:[%s2 + $0x198] sm:$0xff]
  %v108 = vld [vmem:[%s2 + $0x1a0] sm:$0xff]
  %v109 = vld [vmem:[%s2 + $0x1a8] sm:$0xff]
  %v110 = vld [vmem:[%s2 + $0x1b0] sm:$0xff]
  %v111 = vld [vmem:[%s2 + $0x1b8] sm:$0xff]
  %v112 = vld [vmem:[%s2 + $0x1c0] sm:$0xff]
  %v113 = vld [vmem:[%s2 + $0x1c8] sm:$0xff]
  %v114 = vld [vmem:[%s2 + $0x1d0] sm:$0xff]
  %v115 = vld [vmem:[%s2 + $0x1d8] sm:$0xff]
  %v116 = vld [vmem:[%s2 + $0x1e0] sm:$0xff]
  %v117 = vld [vmem:[%s2 + $0x1e8] sm:$0xff]
  %v118 = vld [vmem:[%s2 + $0x1f0] sm:$0xff]
  %v119 = vld [vmem:[%s2 + $0x1f8] sm:$0xff]
  %v120 = vld [vmem:[%s2 + $0x200] sm:$0xff]
  %v121 = vld [vmem:[%s2 + $0x208] sm:$0xff]
  %v122 = vld [vmem:[%s2 + $0x210] sm:$0xff]
  %v123 = vld [vmem:[%s2 + $0x218] sm:$0xff]
  %v124 = vld [vmem:[%s2 + $0x220] sm:$0xff]
  %v125 = vld [vmem:[%s2 + $0x228] sm:$0xff]
  %v126 = vld [vmem:[%s2 + $0x230] sm:$0xff]
  %v127 = vld [vmem:[%s2 + $0x238] sm:$0xff]
  %v128 = vld [vmem:[%s2 + $0x240] sm:$0xff]
  %v129 = vld [vmem:[%s2 + $0x248] sm:$0xff]
  %v130 = vld [vmem:[%s2 + $0x250] sm:$0xff]
  %v131 = vld [vmem:[%s2 + $0x258] sm:$0xff]
  %v132 = vld [vmem:[%s2 + $0x260] sm:$0xff]
  %v133 = vld [vmem:[%s2 + $0x268] sm:$0xff]
  %v134 = vld [vmem:[%s2 + $0x270] sm:$0xff]
  %v135 = vld [vmem:[%s2 + $0x278] sm:$0xff]
  %v136 = vld [vmem:[%s2 + $0x280] sm:$0xff]
  %v137 = vld [vmem:[%s2 + $0x288] sm:$0xff]
  %v138 = vld [vmem:[%s2 + $0x290] sm:$0xff]
  %v139 = vld [vmem:[%s2 + $0x298] sm:$0xff]
  %v140 = vld [vmem:[%s2 + $0x2a0] sm:$0xff]
  %v141 = vld [vmem:[%s2 + $0x2a8] sm:$0xff]
  %v142 = vld [vmem:[%s2 + $0x2b0] sm:$0xff]
  %v143 = vld [vmem:[%s2 + $0x2b8] sm:$0xff]
  %v144 = vld [vmem:[%s2 + $0x2c0] sm:$0xff]
  %v145 = vld [vmem:[%s2 + $0x2c8] sm:$0xff]
  %v146 = vld [vmem:[%s2 + $0x2d0] sm:$0xff]
  %v147 = vld [vmem:[%s2 + $0x2d8] sm:$0xff]
  %v148 = vld [vmem:[%s2 + $0x2e0] sm:$0xff]
  %v149 = vld [vmem:[%s2 + $0x2e8] sm:$0xff]
  %v150 = vld [vmem:[%s2 + $0x2f0] sm:$0xff]
  %v151 = vld [vmem:[%s2 + $0x2f8] sm:$0xff]
  %v152 = vld [vmem:[%s3] sm:$0x3]
  %v154 = vlaneseq
  %v155 = vshrl.u32 %v154, 7
  %v156 = vsub.s32 0, %v155
  %v157 = vrot.slane %v152, %v156
  %v158 = vlaneseq
  %v159 = vshrl.u32 %v158, 7
  %v160 = vsub.s32 1, %v159
  %v161 = vrot.slane %v152, %v160
  %v170 = vunpack.c.l.b16 %v50
  %v171 = vunpack.c.h.b16 %v50
  %v172 = vunpack.c.l.b16 %v51
  %v173 = vunpack.c.h.b16 %v51
  %v174 = vunpack.c.l.b16 %v52
  %v175 = vunpack.c.h.b16 %v52
  %v176 = vunpack.c.l.b16 %v53
  %v177 = vunpack.c.h.b16 %v53
  %v178 = vunpack.c.l.b16 %v54
  %v179 = vunpack.c.h.b16 %v54
  %v180 = vunpack.c.l.b16 %v55
  %v181 = vunpack.c.h.b16 %v55
  %v182 = vpack.c.b16 %v176, %v170
  %v183 = vpack.c.b16 %v177, %v171
  %v184 = vpack.c.b16 %v178, %v172
  %v185 = vpack.c.b16 %v179, %v173
  %v186 = vpack.c.b16 %v180, %v174
  %v187 = vpack.c.b16 %v181, %v175
  %v290 = vunpack.c.l.b16 %v56
  %v291 = vunpack.c.h.b16 %v56
  %v292 = vunpack.c.l.b16 %v57
  %v293 = vunpack.c.h.b16 %v57
  %v294 = vunpack.c.l.b16 %v58
  %v295 = vunpack.c.h.b16 %v58
  %v296 = vunpack.c.l.b16 %v59
  %v297 = vunpack.c.h.b16 %v59
  %v298 = vunpack.c.l.b16 %v60
  %v299 = vunpack.c.h.b16 %v60
  %v300 = vunpack.c.l.b16 %v61
  %v301 = vunpack.c.h.b16 %v61
  %v302 = vunpack.c.l.b16 %v62
  %v303 = vunpack.c.h.b16 %v62
  %v304 = vunpack.c.l.b16 %v63
  %v305 = vunpack.c.h.b16 %v63
  %v306 = vunpack.c.l.b16 %v64
  %v307 = vunpack.c.h.b16 %v64
  %v308 = vunpack.c.l.b16 %v65
  %v309 = vunpack.c.h.b16 %v65
  %v310 = vunpack.c.l.b16 %v66
  %v311 = vunpack.c.h.b16 %v66
  %v312 = vunpack.c.l.b16 %v67
  %v313 = vunpack.c.h.b16 %v67
  %v314 = vunpack.c.l.b16 %v68
  %v315 = vunpack.c.h.b16 %v68
  %v316 = vunpack.c.l.b16 %v69
  %v317 = vunpack.c.h.b16 %v69
  %v318 = vunpack.c.l.b16 %v70
  %v319 = vunpack.c.h.b16 %v70
  %v320 = vunpack.c.l.b16 %v71
  %v321 = vunpack.c.h.b16 %v71
  %v322 = vunpack.c.l.b16 %v72
  %v323 = vunpack.c.h.b16 %v72
  %v324 = vunpack.c.l.b16 %v73
  %v325 = vunpack.c.h.b16 %v73
  %v326 = vunpack.c.l.b16 %v74
  %v327 = vunpack.c.h.b16 %v74
  %v328 = vunpack.c.l.b16 %v75
  %v329 = vunpack.c.h.b16 %v75
  %v330 = vunpack.c.l.b16 %v76
  %v331 = vunpack.c.h.b16 %v76
  %v332 = vunpack.c.l.b16 %v77
  %v333 = vunpack.c.h.b16 %v77
  %v334 = vunpack.c.l.b16 %v78
  %v335 = vunpack.c.h.b16 %v78
  %v336 = vunpack.c.l.b16 %v79
  %v337 = vunpack.c.h.b16 %v79
  %v338 = vunpack.c.l.b16 %v80
  %v339 = vunpack.c.h.b16 %v80
  %v340 = vunpack.c.l.b16 %v81
  %v341 = vunpack.c.h.b16 %v81
  %v342 = vunpack.c.l.b16 %v82
  %v343 = vunpack.c.h.b16 %v82
  %v344 = vunpack.c.l.b16 %v83
  %v345 = vunpack.c.h.b16 %v83
  %v346 = vunpack.c.l.b16 %v84
  %v347 = vunpack.c.h.b16 %v84
  %v348 = vunpack.c.l.b16 %v85
  %v349 = vunpack.c.h.b16 %v85
  %v350 = vunpack.c.l.b16 %v86
  %v351 = vunpack.c.h.b16 %v86
  %v352 = vunpack.c.l.b16 %v87
  %v353 = vunpack.c.h.b16 %v87
  %v354 = vunpack.c.l.b16 %v88
  %v355 = vunpack.c.h.b16 %v88
  %v356 = vunpack.c.l.b16 %v89
  %v357 = vunpack.c.h.b16 %v89
  %v358 = vunpack.c.l.b16 %v90
  %v359 = vunpack.c.h.b16 %v90
  %v360 = vunpack.c.l.b16 %v91
  %v361 = vunpack.c.h.b16 %v91
  %v362 = vunpack.c.l.b16 %v92
  %v363 = vunpack.c.h.b16 %v92
  %v364 = vunpack.c.l.b16 %v93
  %v365 = vunpack.c.h.b16 %v93
  %v366 = vunpack.c.l.b16 %v94
  %v367 = vunpack.c.h.b16 %v94
  %v368 = vunpack.c.l.b16 %v95
  %v369 = vunpack.c.h.b16 %v95
  %v370 = vunpack.c.l.b16 %v96
  %v371 = vunpack.c.h.b16 %v96
  %v372 = vunpack.c.l.b16 %v97
  %v373 = vunpack.c.h.b16 %v97
  %v374 = vunpack.c.l.b16 %v98
  %v375 = vunpack.c.h.b16 %v98
  %v376 = vunpack.c.l.b16 %v99
  %v377 = vunpack.c.h.b16 %v99
  %v378 = vunpack.c.l.b16 %v100
  %v379 = vunpack.c.h.b16 %v100
  %v380 = vunpack.c.l.b16 %v101
  %v381 = vunpack.c.h.b16 %v101
  %v382 = vunpack.c.l.b16 %v102
  %v383 = vunpack.c.h.b16 %v102
  %v384 = vunpack.c.l.b16 %v103
  %v385 = vunpack.c.h.b16 %v103
  %v386 = vunpack.c.l.b16 %v104
  %v387 = vunpack.c.h.b16 %v104
  %v388 = vunpack.c.l.b16 %v105
  %v389 = vunpack.c.h.b16 %v105
  %v390 = vunpack.c.l.b16 %v106
  %v391 = vunpack.c.h.b16 %v106
  %v392 = vunpack.c.l.b16 %v107
  %v393 = vunpack.c.h.b16 %v107
  %v394 = vunpack.c.l.b16 %v108
  %v395 = vunpack.c.h.b16 %v108
  %v396 = vunpack.c.l.b16 %v109
  %v397 = vunpack.c.h.b16 %v109
  %v398 = vunpack.c.l.b16 %v110
  %v399 = vunpack.c.h.b16 %v110
  %v400 = vunpack.c.l.b16 %v111
  %v401 = vunpack.c.h.b16 %v111
  %v402 = vunpack.c.l.b16 %v112
  %v403 = vunpack.c.h.b16 %v112
  %v404 = vunpack.c.l.b16 %v113
  %v405 = vunpack.c.h.b16 %v113
  %v406 = vunpack.c.l.b16 %v114
  %v407 = vunpack.c.h.b16 %v114
  %v408 = vunpack.c.l.b16 %v115
  %v409 = vunpack.c.h.b16 %v115
  %v410 = vunpack.c.l.b16 %v116
  %v411 = vunpack.c.h.b16 %v116
  %v412 = vunpack.c.l.b16 %v117
  %v413 = vunpack.c.h.b16 %v117
  %v414 = vunpack.c.l.b16 %v118
  %v415 = vunpack.c.h.b16 %v118
  %v416 = vunpack.c.l.b16 %v119
  %v417 = vunpack.c.h.b16 %v119
  %v418 = vunpack.c.l.b16 %v120
  %v419 = vunpack.c.h.b16 %v120
  %v420 = vunpack.c.l.b16 %v121
  %v421 = vunpack.c.h.b16 %v121
  %v422 = vunpack.c.l.b16 %v122
  %v423 = vunpack.c.h.b16 %v122
  %v424 = vunpack.c.l.b16 %v123
  %v425 = vunpack.c.h.b16 %v123
  %v426 = vunpack.c.l.b16 %v124
  %v427 = vunpack.c.h.b16 %v124
  %v428 = vunpack.c.l.b16 %v125
  %v429 = vunpack.c.h.b16 %v125
  %v430 = vunpack.c.l.b16 %v126
  %v431 = vunpack.c.h.b16 %v126
  %v432 = vunpack.c.l.b16 %v127
  %v433 = vunpack.c.h.b16 %v127
  %v434 = vunpack.c.l.b16 %v128
  %v435 = vunpack.c.h.b16 %v128
  %v436 = vunpack.c.l.b16 %v129
  %v437 = vunpack.c.h.b16 %v129
  %v438 = vunpack.c.l.b16 %v130
  %v439 = vunpack.c.h.b16 %v130
  %v440 = vunpack.c.l.b16 %v131
  %v441 = vunpack.c.h.b16 %v131
  %v442 = vunpack.c.l.b16 %v132
  %v443 = vunpack.c.h.b16 %v132
  %v444 = vunpack.c.l.b16 %v133
  %v445 = vunpack.c.h.b16 %v133
  %v446 = vunpack.c.l.b16 %v134
  %v447 = vunpack.c.h.b16 %v134
  %v448 = vunpack.c.l.b16 %v135
  %v449 = vunpack.c.h.b16 %v135
  %v450 = vunpack.c.l.b16 %v136
  %v451 = vunpack.c.h.b16 %v136
  %v452 = vunpack.c.l.b16 %v137
  %v453 = vunpack.c.h.b16 %v137
  %v454 = vunpack.c.l.b16 %v138
  %v455 = vunpack.c.h.b16 %v138
  %v456 = vunpack.c.l.b16 %v139
  %v457 = vunpack.c.h.b16 %v139
  %v458 = vunpack.c.l.b16 %v140
  %v459 = vunpack.c.h.b16 %v140
  %v460 = vunpack.c.l.b16 %v141
  %v461 = vunpack.c.h.b16 %v141
  %v462 = vunpack.c.l.b16 %v142
  %v463 = vunpack.c.h.b16 %v142
  %v464 = vunpack.c.l.b16 %v143
  %v465 = vunpack.c.h.b16 %v143
  %v466 = vunpack.c.l.b16 %v144
  %v467 = vunpack.c.h.b16 %v144
  %v468 = vunpack.c.l.b16 %v145
  %v469 = vunpack.c.h.b16 %v145
  %v470 = vunpack.c.l.b16 %v146
  %v471 = vunpack.c.h.b16 %v146
  %v472 = vunpack.c.l.b16 %v147
  %v473 = vunpack.c.h.b16 %v147
  %v474 = vunpack.c.l.b16 %v148
  %v475 = vunpack.c.h.b16 %v148
  %v476 = vunpack.c.l.b16 %v149
  %v477 = vunpack.c.h.b16 %v149
  %v478 = vunpack.c.l.b16 %v150
  %v479 = vunpack.c.h.b16 %v150
  %v480 = vunpack.c.l.b16 %v151
  %v481 = vunpack.c.h.b16 %v151
  %v482 = vpack.c.b16 %v292, %v290
  %v483 = vpack.c.b16 %v293, %v291
  %v484 = vpack.c.b16 %v296, %v294
  %v485 = vpack.c.b16 %v297, %v295
  %v486 = vpack.c.b16 %v300, %v298
  %v487 = vpack.c.b16 %v301, %v299
  %v488 = vpack.c.b16 %v304, %v302
  %v489 = vpack.c.b16 %v305, %v303
  %v490 = vpack.c.b16 %v308, %v306
  %v491 = vpack.c.b16 %v309, %v307
  %v492 = vpack.c.b16 %v312, %v310
  %v493 = vpack.c.b16 %v313, %v311
  %v494 = vpack.c.b16 %v316, %v314
  %v495 = vpack.c.b16 %v317, %v315
  %v496 = vpack.c.b16 %v320, %v318
  %v497 = vpack.c.b16 %v321, %v319
  %v498 = vpack.c.b16 %v324, %v322
  %v499 = vpack.c.b16 %v325, %v323
  %v500 = vpack.c.b16 %v328, %v326
  %v501 = vpack.c.b16 %v329, %v327
  %v502 = vpack.c.b16 %v332, %v330
  %v503 = vpack.c.b16 %v333, %v331
  %v504 = vpack.c.b16 %v336, %v334
  %v505 = vpack.c.b16 %v337, %v335
  %v506 = vpack.c.b16 %v340, %v338
  %v507 = vpack.c.b16 %v341, %v339
  %v508 = vpack.c.b16 %v344, %v342
  %v509 = vpack.c.b16 %v345, %v343
  %v510 = vpack.c.b16 %v348, %v346
  %v511 = vpack.c.b16 %v349, %v347
  %v512 = vpack.c.b16 %v352, %v350
  %v513 = vpack.c.b16 %v353, %v351
  %v514 = vpack.c.b16 %v356, %v354
  %v515 = vpack.c.b16 %v357, %v355
  %v516 = vpack.c.b16 %v360, %v358
  %v517 = vpack.c.b16 %v361, %v359
  %v518 = vpack.c.b16 %v364, %v362
  %v519 = vpack.c.b16 %v365, %v363
  %v520 = vpack.c.b16 %v368, %v366
  %v521 = vpack.c.b16 %v369, %v367
  %v522 = vpack.c.b16 %v372, %v370
  %v523 = vpack.c.b16 %v373, %v371
  %v524 = vpack.c.b16 %v376, %v374
  %v525 = vpack.c.b16 %v377, %v375
  %v526 = vpack.c.b16 %v380, %v378
  %v527 = vpack.c.b16 %v381, %v379
  %v528 = vpack.c.b16 %v384, %v382
  %v529 = vpack.c.b16 %v385, %v383
  %v530 = vpack.c.b16 %v388, %v386
  %v531 = vpack.c.b16 %v389, %v387
  %v532 = vpack.c.b16 %v392, %v390
  %v533 = vpack.c.b16 %v393, %v391
  %v534 = vpack.c.b16 %v396, %v394
  %v535 = vpack.c.b16 %v397, %v395
  %v536 = vpack.c.b16 %v400, %v398
  %v537 = vpack.c.b16 %v401, %v399
  %v538 = vpack.c.b16 %v404, %v402
  %v539 = vpack.c.b16 %v405, %v403
  %v540 = vpack.c.b16 %v408, %v406
  %v541 = vpack.c.b16 %v409, %v407
  %v542 = vpack.c.b16 %v412, %v410
  %v543 = vpack.c.b16 %v413, %v411
  %v544 = vpack.c.b16 %v416, %v414
  %v545 = vpack.c.b16 %v417, %v415
  %v546 = vpack.c.b16 %v420, %v418
  %v547 = vpack.c.b16 %v421, %v419
  %v548 = vpack.c.b16 %v424, %v422
  %v549 = vpack.c.b16 %v425, %v423
  %v550 = vpack.c.b16 %v428, %v426
  %v551 = vpack.c.b16 %v429, %v427
  %v552 = vpack.c.b16 %v432, %v430
  %v553 = vpack.c.b16 %v433, %v431
  %v554 = vpack.c.b16 %v436, %v434
  %v555 = vpack.c.b16 %v437, %v435
  %v556 = vpack.c.b16 %v440, %v438
  %v557 = vpack.c.b16 %v441, %v439
  %v558 = vpack.c.b16 %v444, %v442
  %v559 = vpack.c.b16 %v445, %v443
  %v560 = vpack.c.b16 %v448, %v446
  %v561 = vpack.c.b16 %v449, %v447
  %v562 = vpack.c.b16 %v452, %v450
  %v563 = vpack.c.b16 %v453, %v451
  %v564 = vpack.c.b16 %v456, %v454
  %v565 = vpack.c.b16 %v457, %v455
  %v566 = vpack.c.b16 %v460, %v458
  %v567 = vpack.c.b16 %v461, %v459
  %v568 = vpack.c.b16 %v464, %v462
  %v569 = vpack.c.b16 %v465, %v463
  %v570 = vpack.c.b16 %v468, %v466
  %v571 = vpack.c.b16 %v469, %v467
  %v572 = vpack.c.b16 %v472, %v470
  %v573 = vpack.c.b16 %v473, %v471
  %v574 = vpack.c.b16 %v476, %v474
  %v575 = vpack.c.b16 %v477, %v475
  %v576 = vpack.c.b16 %v480, %v478
  %v577 = vpack.c.b16 %v481, %v479
  %674 = vmatprep.subr.bf16.mxu0 %v497
  %675 = vmatpush1.bf16.msra.mxu0 %v496
  %676 = vmatprep.subr.bf16.mxu0 %v495
  %677 = vmatpush1.bf16.msra.mxu0 %v494
  %678 = vmatprep.subr.bf16.mxu0 %v493
  %679 = vmatpush1.bf16.msra.mxu0 %v492
  %680 = vmatprep.subr.bf16.mxu0 %v491
  %681 = vmatpush1.bf16.msra.mxu0 %v490
  %682 = vmatprep.subr.bf16.mxu0 %v489
  %683 = vmatpush1.bf16.msra.mxu0 %v488
  %684 = vmatprep.subr.bf16.mxu0 %v487
  %685 = vmatpush1.bf16.msra.mxu0 %v486
  %686 = vmatprep.subr.bf16.mxu0 %v485
  %687 = vmatpush1.bf16.msra.mxu0 %v484
  %688 = vmatprep.subr.bf16.mxu0 %v483
  %689 = vmatpush1.bf16.msra.mxu0 %v482
  %690 = vmatprep.subr.bf16.mxu0 %v513
  %691 = vmatpush2.bf16.msra.mxu0 %v512
  %692 = vmatprep.subr.bf16.mxu0 %v511
  %693 = vmatpush2.bf16.msra.mxu0 %v510
  %694 = vmatprep.subr.bf16.mxu0 %v509
  %695 = vmatpush2.bf16.msra.mxu0 %v508
  %696 = vmatprep.subr.bf16.mxu0 %v507
  %697 = vmatpush2.bf16.msra.mxu0 %v506
  %698 = vmatprep.subr.bf16.mxu0 %v505
  %699 = vmatpush2.bf16.msra.mxu0 %v504
  %700 = vmatprep.subr.bf16.mxu0 %v503
  %701 = vmatpush2.bf16.msra.mxu0 %v502
  %702 = vmatprep.subr.bf16.mxu0 %v501
  %703 = vmatpush2.bf16.msra.mxu0 %v500
  %704 = vmatprep.subr.bf16.mxu0 %v499
  %705 = vmatpush2.bf16.msra.mxu0 %v498
  %706 = vmatprep.mubr.bf16.mxu0 %v183
  %707 = vmatmul.mubr.bf16.gmra.mxu0 %v182
  %v708 = vpop.f32.mrf.mxu0
  %v709 = vadd.f32 %v157, %v708
  %v710 = vpop.f32.mrf.mxu0
  %v711 = vadd.f32 %v161, %v710
  %v712 = vpop.f32.mrf.mxu0
  %v713 = vadd.f32 %v157, %v712
  %v714 = vpop.f32.mrf.mxu0
  %v715 = vadd.f32 %v161, %v714
  %716 = vdwg.mxu0
  %717 = vmatprep.subr.bf16.mxu0 %v529
  %718 = vmatpush1.bf16.msra.mxu0 %v528
  %719 = vmatprep.subr.bf16.mxu0 %v527
  %720 = vmatpush1.bf16.msra.mxu0 %v526
  %721 = vmatprep.subr.bf16.mxu0 %v525
  %722 = vmatpush1.bf16.msra.mxu0 %v524
  %723 = vmatprep.subr.bf16.mxu0 %v523
  %724 = vmatpush1.bf16.msra.mxu0 %v522
  %725 = vmatprep.subr.bf16.mxu0 %v521
  %726 = vmatpush1.bf16.msra.mxu0 %v520
  %727 = vmatprep.subr.bf16.mxu0 %v519
  %728 = vmatpush1.bf16.msra.mxu0 %v518
  %729 = vmatprep.subr.bf16.mxu0 %v517
  %730 = vmatpush1.bf16.msra.mxu0 %v516
  %731 = vmatprep.subr.bf16.mxu0 %v515
  %732 = vmatpush1.bf16.msra.mxu0 %v514
  %733 = vmatprep.subr.bf16.mxu0 %v545
  %734 = vmatpush2.bf16.msra.mxu0 %v544
  %735 = vmatprep.subr.bf16.mxu0 %v543
  %736 = vmatpush2.bf16.msra.mxu0 %v542
  %737 = vmatprep.subr.bf16.mxu0 %v541
  %738 = vmatpush2.bf16.msra.mxu0 %v540
  %739 = vmatprep.subr.bf16.mxu0 %v539
  %740 = vmatpush2.bf16.msra.mxu0 %v538
  %741 = vmatprep.subr.bf16.mxu0 %v537
  %742 = vmatpush2.bf16.msra.mxu0 %v536
  %743 = vmatprep.subr.bf16.mxu0 %v535
  %744 = vmatpush2.bf16.msra.mxu0 %v534
  %745 = vmatprep.subr.bf16.mxu0 %v533
  %746 = vmatpush2.bf16.msra.mxu0 %v532
  %747 = vmatprep.subr.bf16.mxu0 %v531
  %748 = vmatpush2.bf16.msra.mxu0 %v530
  %749 = vmatprep.mubr.bf16.mxu0 %v185
  %750 = vmatmul.mubr.bf16.gmra.mxu0 %v184
  %v751 = vpop.f32.mrf.mxu0
  %v752 = vadd.f32 %v709, %v751
  %v753 = vpop.f32.mrf.mxu0
  %v754 = vadd.f32 %v711, %v753
  %v755 = vpop.f32.mrf.mxu0
  %v756 = vadd.f32 %v713, %v755
  %v757 = vpop.f32.mrf.mxu0
  %v758 = vadd.f32 %v715, %v757
  %759 = vdwg.mxu0
  %760 = vmatprep.subr.bf16.mxu0 %v561
  %761 = vmatpush1.bf16.msra.mxu0 %v560
  %762 = vmatprep.subr.bf16.mxu0 %v559
  %763 = vmatpush1.bf16.msra.mxu0 %v558
  %764 = vmatprep.subr.bf16.mxu0 %v557
  %765 = vmatpush1.bf16.msra.mxu0 %v556
  %766 = vmatprep.subr.bf16.mxu0 %v555
  %767 = vmatpush1.bf16.msra.mxu0 %v554
  %768 = vmatprep.subr.bf16.mxu0 %v553
  %769 = vmatpush1.bf16.msra.mxu0 %v552
  %770 = vmatprep.subr.bf16.mxu0 %v551
  %771 = vmatpush1.bf16.msra.mxu0 %v550
  %772 = vmatprep.subr.bf16.mxu0 %v549
  %773 = vmatpush1.bf16.msra.mxu0 %v548
  %774 = vmatprep.subr.bf16.mxu0 %v547
  %775 = vmatpush1.bf16.msra.mxu0 %v546
  %776 = vmatprep.subr.bf16.mxu0 %v577
  %777 = vmatpush2.bf16.msra.mxu0 %v576
  %778 = vmatprep.subr.bf16.mxu0 %v575
  %779 = vmatpush2.bf16.msra.mxu0 %v574
  %780 = vmatprep.subr.bf16.mxu0 %v573
  %781 = vmatpush2.bf16.msra.mxu0 %v572
  %782 = vmatprep.subr.bf16.mxu0 %v571
  %783 = vmatpush2.bf16.msra.mxu0 %v570
  %784 = vmatprep.subr.bf16.mxu0 %v569
  %785 = vmatpush2.bf16.msra.mxu0 %v568
  %786 = vmatprep.subr.bf16.mxu0 %v567
  %787 = vmatpush2.bf16.msra.mxu0 %v566
  %788 = vmatprep.subr.bf16.mxu0 %v565
  %789 = vmatpush2.bf16.msra.mxu0 %v564
  %790 = vmatprep.subr.bf16.mxu0 %v563
  %791 = vmatpush2.bf16.msra.mxu0 %v562
  %792 = vmatprep.mubr.bf16.mxu0 %v187
  %793 = vmatmul.mubr.bf16.gmra.mxu0 %v186
  %v794 = vpop.f32.mrf.mxu0
  %v795 = vadd.f32 %v752, %v794
  %v796 = vpop.f32.mrf.mxu0
  %v797 = vadd.f32 %v754, %v796
  %v798 = vpop.f32.mrf.mxu0
  %v799 = vadd.f32 %v756, %v798
  %v800 = vpop.f32.mrf.mxu0
  %v801 = vadd.f32 %v758, %v800
  %802 = vdwg.mxu0
  %v803 = vmax.f32 %v795, 0.0
  %v804 = vmax.f32 %v797, 0.0
  %v805 = vmax.f32 %v799, 0.0
  %v806 = vmax.f32 %v801, 0.0
  %v807 = vpack.c.bf16 %v805, %v803
  %v808 = vpack.c.bf16 %v806, %v804
  %v809 = vld [vmem:[%s4] sm:$0xff]
  %v810 = vld [vmem:[%s4 + $0x8] sm:$0xff]
  %v811 = vld [vmem:[%s4 + $0x10] sm:$0xff]
  %v812 = vld [vmem:[%s4 + $0x18] sm:$0xff]
  %v813 = vld [vmem:[%s4 + $0x20] sm:$0xff]
  %v814 = vld [vmem:[%s4 + $0x28] sm:$0xff]
  %v815 = vld [vmem:[%s4 + $0x30] sm:$0xff]
  %v816 = vld [vmem:[%s4 + $0x38] sm:$0xff]
  %v817 = vld [vmem:[%s4 + $0x40] sm:$0xff]
  %v818 = vld [vmem:[%s4 + $0x48] sm:$0xff]
  %v819 = vld [vmem:[%s4 + $0x50] sm:$0xff]
  %v820 = vld [vmem:[%s4 + $0x58] sm:$0xff]
  %v821 = vld [vmem:[%s4 + $0x60] sm:$0xff]
  %v822 = vld [vmem:[%s4 + $0x68] sm:$0xff]
  %v823 = vld [vmem:[%s4 + $0x70] sm:$0xff]
  %v824 = vld [vmem:[%s4 + $0x78] sm:$0xff]
  %v825 = vld [vmem:[%s4 + $0x80] sm:$0xff]
  %v826 = vld [vmem:[%s4 + $0x88] sm:$0xff]
  %v827 = vld [vmem:[%s4 + $0x90] sm:$0xff]
  %v828 = vld [vmem:[%s4 + $0x98] sm:$0xff]
  %v829 = vld [vmem:[%s4 + $0xa0] sm:$0xff]
  %v830 = vld [vmem:[%s4 + $0xa8] sm:$0xff]
  %v831 = vld [vmem:[%s4 + $0xb0] sm:$0xff]
  %v832 = vld [vmem:[%s4 + $0xb8] sm:$0xff]
  %v833 = vld [vmem:[%s4 + $0xc0] sm:$0xff]
  %v834 = vld [vmem:[%s4 + $0xc8] sm:$0xff]
  %v835 = vld [vmem:[%s4 + $0xd0] sm:$0xff]
  %v836 = vld [vmem:[%s4 + $0xd8] sm:$0xff]
  %v837 = vld [vmem:[%s4 + $0xe0] sm:$0xff]
  %v838 = vld [vmem:[%s4 + $0xe8] sm:$0xff]
  %v839 = vld [vmem:[%s4 + $0xf0] sm:$0xff]
  %v840 = vld [vmem:[%s4 + $0xf8] sm:$0xff]
  %v841 = vld [vmem:[%s5] sm:$0x3]
  %v843 = vlaneseq
  %v844 = vshrl.u32 %v843, 7
  %v845 = vsub.s32 0, %v844
  %v846 = vrot.slane %v841, %v845
  %v847 = vlaneseq
  %v848 = vshrl.u32 %v847, 7
  %v849 = vsub.s32 1, %v848
  %v850 = vrot.slane %v841, %v849
  %v885 = vunpack.c.l.b16 %v809
  %v886 = vunpack.c.h.b16 %v809
  %v887 = vunpack.c.l.b16 %v810
  %v888 = vunpack.c.h.b16 %v810
  %v889 = vunpack.c.l.b16 %v811
  %v890 = vunpack.c.h.b16 %v811
  %v891 = vunpack.c.l.b16 %v812
  %v892 = vunpack.c.h.b16 %v812
  %v893 = vunpack.c.l.b16 %v813
  %v894 = vunpack.c.h.b16 %v813
  %v895 = vunpack.c.l.b16 %v814
  %v896 = vunpack.c.h.b16 %v814
  %v897 = vunpack.c.l.b16 %v815
  %v898 = vunpack.c.h.b16 %v815
  %v899 = vunpack.c.l.b16 %v816
  %v900 = vunpack.c.h.b16 %v816
  %v901 = vunpack.c.l.b16 %v817
  %v902 = vunpack.c.h.b16 %v817
  %v903 = vunpack.c.l.b16 %v818
  %v904 = vunpack.c.h.b16 %v818
  %v905 = vunpack.c.l.b16 %v819
  %v906 = vunpack.c.h.b16 %v819
  %v907 = vunpack.c.l.b16 %v820
  %v908 = vunpack.c.h.b16 %v820
  %v909 = vunpack.c.l.b16 %v821
  %v910 = vunpack.c.h.b16 %v821
  %v911 = vunpack.c.l.b16 %v822
  %v912 = vunpack.c.h.b16 %v822
  %v913 = vunpack.c.l.b16 %v823
  %v914 = vunpack.c.h.b16 %v823
  %v915 = vunpack.c.l.b16 %v824
  %v916 = vunpack.c.h.b16 %v824
  %v917 = vunpack.c.l.b16 %v825
  %v918 = vunpack.c.h.b16 %v825
  %v919 = vunpack.c.l.b16 %v826
  %v920 = vunpack.c.h.b16 %v826
  %v921 = vunpack.c.l.b16 %v827
  %v922 = vunpack.c.h.b16 %v827
  %v923 = vunpack.c.l.b16 %v828
  %v924 = vunpack.c.h.b16 %v828
  %v925 = vunpack.c.l.b16 %v829
  %v926 = vunpack.c.h.b16 %v829
  %v927 = vunpack.c.l.b16 %v830
  %v928 = vunpack.c.h.b16 %v830
  %v929 = vunpack.c.l.b16 %v831
  %v930 = vunpack.c.h.b16 %v831
  %v931 = vunpack.c.l.b16 %v832
  %v932 = vunpack.c.h.b16 %v832
  %v933 = vunpack.c.l.b16 %v833
  %v934 = vunpack.c.h.b16 %v833
  %v935 = vunpack.c.l.b16 %v834
  %v936 = vunpack.c.h.b16 %v834
  %v937 = vunpack.c.l.b16 %v835
  %v938 = vunpack.c.h.b16 %v835
  %v939 = vunpack.c.l.b16 %v836
  %v940 = vunpack.c.h.b16 %v836
  %v941 = vunpack.c.l.b16 %v837
  %v942 = vunpack.c.h.b16 %v837
  %v943 = vunpack.c.l.b16 %v838
  %v944 = vunpack.c.h.b16 %v838
  %v945 = vunpack.c.l.b16 %v839
  %v946 = vunpack.c.h.b16 %v839
  %v947 = vunpack.c.l.b16 %v840
  %v948 = vunpack.c.h.b16 %v840
  %v949 = vpack.c.b16 %v887, %v885
  %v950 = vpack.c.b16 %v888, %v886
  %v951 = vpack.c.b16 %v891, %v889
  %v952 = vpack.c.b16 %v892, %v890
  %v953 = vpack.c.b16 %v895, %v893
  %v954 = vpack.c.b16 %v896, %v894
  %v955 = vpack.c.b16 %v899, %v897
  %v956 = vpack.c.b16 %v900, %v898
  %v957 = vpack.c.b16 %v903, %v901
  %v958 = vpack.c.b16 %v904, %v902
  %v959 = vpack.c.b16 %v907, %v905
  %v960 = vpack.c.b16 %v908, %v906
  %v961 = vpack.c.b16 %v911, %v909
  %v962 = vpack.c.b16 %v912, %v910
  %v963 = vpack.c.b16 %v915, %v913
  %v964 = vpack.c.b16 %v916, %v914
  %v965 = vpack.c.b16 %v919, %v917
  %v966 = vpack.c.b16 %v920, %v918
  %v967 = vpack.c.b16 %v923, %v921
  %v968 = vpack.c.b16 %v924, %v922
  %v969 = vpack.c.b16 %v927, %v925
  %v970 = vpack.c.b16 %v928, %v926
  %v971 = vpack.c.b16 %v931, %v929
  %v972 = vpack.c.b16 %v932, %v930
  %v973 = vpack.c.b16 %v935, %v933
  %v974 = vpack.c.b16 %v936, %v934
  %v975 = vpack.c.b16 %v939, %v937
  %v976 = vpack.c.b16 %v940, %v938
  %v977 = vpack.c.b16 %v943, %v941
  %v978 = vpack.c.b16 %v944, %v942
  %v979 = vpack.c.b16 %v947, %v945
  %v980 = vpack.c.b16 %v948, %v946
  %1013 = vmatprep.subr.bf16.mxu0 %v964
  %1014 = vmatpush1.bf16.msra.mxu0 %v963
  %1015 = vmatprep.subr.bf16.mxu0 %v962
  %1016 = vmatpush1.bf16.msra.mxu0 %v961
  %1017 = vmatprep.subr.bf16.mxu0 %v960
  %1018 = vmatpush1.bf16.msra.mxu0 %v959
  %1019 = vmatprep.subr.bf16.mxu0 %v958
  %1020 = vmatpush1.bf16.msra.mxu0 %v957
  %1021 = vmatprep.subr.bf16.mxu0 %v956
  %1022 = vmatpush1.bf16.msra.mxu0 %v955
  %1023 = vmatprep.subr.bf16.mxu0 %v954
  %1024 = vmatpush1.bf16.msra.mxu0 %v953
  %1025 = vmatprep.subr.bf16.mxu0 %v952
  %1026 = vmatpush1.bf16.msra.mxu0 %v951
  %1027 = vmatprep.subr.bf16.mxu0 %v950
  %1028 = vmatpush1.bf16.msra.mxu0 %v949
  %1029 = vmatprep.subr.bf16.mxu0 %v980
  %1030 = vmatpush2.bf16.msra.mxu0 %v979
  %1031 = vmatprep.subr.bf16.mxu0 %v978
  %1032 = vmatpush2.bf16.msra.mxu0 %v977
  %1033 = vmatprep.subr.bf16.mxu0 %v976
  %1034 = vmatpush2.bf16.msra.mxu0 %v975
  %1035 = vmatprep.subr.bf16.mxu0 %v974
  %1036 = vmatpush2.bf16.msra.mxu0 %v973
  %1037 = vmatprep.subr.bf16.mxu0 %v972
  %1038 = vmatpush2.bf16.msra.mxu0 %v971
  %1039 = vmatprep.subr.bf16.mxu0 %v970
  %1040 = vmatpush2.bf16.msra.mxu0 %v969
  %1041 = vmatprep.subr.bf16.mxu0 %v968
  %1042 = vmatpush2.bf16.msra.mxu0 %v967
  %1043 = vmatprep.subr.bf16.mxu0 %v966
  %1044 = vmatpush2.bf16.msra.mxu0 %v965
  %1045 = vmatprep.mubr.bf16.mxu0 %v808
  %1046 = vmatmul.mubr.bf16.gmra.mxu0 %v807
  %v1047 = vpop.f32.mrf.mxu0
  %v1048 = vadd.f32 %v846, %v1047
  %v1049 = vpop.f32.mrf.mxu0
  %v1050 = vadd.f32 %v850, %v1049
  %v1051 = vpop.f32.mrf.mxu0
  %v1052 = vadd.f32 %v846, %v1051
  %v1053 = vpop.f32.mrf.mxu0
  %v1054 = vadd.f32 %v850, %v1053
  %1055 = vdwg.mxu0
  %v1056 = vmax.f32 %v1048, 0.0
  %v1057 = vmax.f32 %v1050, 0.0
  %v1058 = vmax.f32 %v1052, 0.0
  %v1059 = vmax.f32 %v1054, 0.0
  %v1060 = vpack.c.bf16 %v1058, %v1056
  %v1061 = vpack.c.bf16 %v1059, %v1057
  %v1062 = vld [vmem:[%s6] sm:$0xff]
  %v1063 = vld [vmem:[%s6 + $0x8] sm:$0xff]
  %v1064 = vld [vmem:[%s6 + $0x10] sm:$0xff]
  %v1065 = vld [vmem:[%s6 + $0x18] sm:$0xff]
  %v1066 = vld [vmem:[%s6 + $0x20] sm:$0xff]
  %v1067 = vld [vmem:[%s6 + $0x28] sm:$0xff]
  %v1068 = vld [vmem:[%s6 + $0x30] sm:$0xff]
  %v1069 = vld [vmem:[%s6 + $0x38] sm:$0xff]
  %v1070 = vld [vmem:[%s6 + $0x40] sm:$0xff]
  %v1071 = vld [vmem:[%s6 + $0x48] sm:$0xff]
  %v1072 = vld [vmem:[%s6 + $0x50] sm:$0xff]
  %v1073 = vld [vmem:[%s6 + $0x58] sm:$0xff]
  %v1074 = vld [vmem:[%s6 + $0x60] sm:$0xff]
  %v1075 = vld [vmem:[%s6 + $0x68] sm:$0xff]
  %v1076 = vld [vmem:[%s6 + $0x70] sm:$0xff]
  %v1077 = vld [vmem:[%s6 + $0x78] sm:$0xff]
  %v1078 = vld [vmem:[%s6 + $0x80] sm:$0xff]
  %v1079 = vld [vmem:[%s6 + $0x88] sm:$0xff]
  %v1080 = vld [vmem:[%s6 + $0x90] sm:$0xff]
  %v1081 = vld [vmem:[%s6 + $0x98] sm:$0xff]
  %v1082 = vld [vmem:[%s6 + $0xa0] sm:$0xff]
  %v1083 = vld [vmem:[%s6 + $0xa8] sm:$0xff]
  %v1084 = vld [vmem:[%s6 + $0xb0] sm:$0xff]
  %v1085 = vld [vmem:[%s6 + $0xb8] sm:$0xff]
  %v1086 = vld [vmem:[%s6 + $0xc0] sm:$0xff]
  %v1087 = vld [vmem:[%s6 + $0xc8] sm:$0xff]
  %v1088 = vld [vmem:[%s6 + $0xd0] sm:$0xff]
  %v1089 = vld [vmem:[%s6 + $0xd8] sm:$0xff]
  %v1090 = vld [vmem:[%s6 + $0xe0] sm:$0xff]
  %v1091 = vld [vmem:[%s6 + $0xe8] sm:$0xff]
  %v1092 = vld [vmem:[%s6 + $0xf0] sm:$0xff]
  %v1093 = vld [vmem:[%s6 + $0xf8] sm:$0xff]
  %v1094 = vld [vmem:[%s7] sm:$0x3]
  %v1096 = vlaneseq
  %v1097 = vshrl.u32 %v1096, 7
  %v1098 = vsub.s32 0, %v1097
  %v1099 = vrot.slane %v1094, %v1098
  %v1100 = vlaneseq
  %v1101 = vshrl.u32 %v1100, 7
  %v1102 = vsub.s32 1, %v1101
  %v1103 = vrot.slane %v1094, %v1102
  %v1138 = vunpack.c.l.b16 %v1062
  %v1139 = vunpack.c.h.b16 %v1062
  %v1140 = vunpack.c.l.b16 %v1063
  %v1141 = vunpack.c.h.b16 %v1063
  %v1142 = vunpack.c.l.b16 %v1064
  %v1143 = vunpack.c.h.b16 %v1064
  %v1144 = vunpack.c.l.b16 %v1065
  %v1145 = vunpack.c.h.b16 %v1065
  %v1146 = vunpack.c.l.b16 %v1066
  %v1147 = vunpack.c.h.b16 %v1066
  %v1148 = vunpack.c.l.b16 %v1067
  %v1149 = vunpack.c.h.b16 %v1067
  %v1150 = vunpack.c.l.b16 %v1068
  %v1151 = vunpack.c.h.b16 %v1068
  %v1152 = vunpack.c.l.b16 %v1069
  %v1153 = vunpack.c.h.b16 %v1069
  %v1154 = vunpack.c.l.b16 %v1070
  %v1155 = vunpack.c.h.b16 %v1070
  %v1156 = vunpack.c.l.b16 %v1071
  %v1157 = vunpack.c.h.b16 %v1071
  %v1158 = vunpack.c.l.b16 %v1072
  %v1159 = vunpack.c.h.b16 %v1072
  %v1160 = vunpack.c.l.b16 %v1073
  %v1161 = vunpack.c.h.b16 %v1073
  %v1162 = vunpack.c.l.b16 %v1074
  %v1163 = vunpack.c.h.b16 %v1074
  %v1164 = vunpack.c.l.b16 %v1075
  %v1165 = vunpack.c.h.b16 %v1075
  %v1166 = vunpack.c.l.b16 %v1076
  %v1167 = vunpack.c.h.b16 %v1076
  %v1168 = vunpack.c.l.b16 %v1077
  %v1169 = vunpack.c.h.b16 %v1077
  %v1170 = vunpack.c.l.b16 %v1078
  %v1171 = vunpack.c.h.b16 %v1078
  %v1172 = vunpack.c.l.b16 %v1079
  %v1173 = vunpack.c.h.b16 %v1079
  %v1174 = vunpack.c.l.b16 %v1080
  %v1175 = vunpack.c.h.b16 %v1080
  %v1176 = vunpack.c.l.b16 %v1081
  %v1177 = vunpack.c.h.b16 %v1081
  %v1178 = vunpack.c.l.b16 %v1082
  %v1179 = vunpack.c.h.b16 %v1082
  %v1180 = vunpack.c.l.b16 %v1083
  %v1181 = vunpack.c.h.b16 %v1083
  %v1182 = vunpack.c.l.b16 %v1084
  %v1183 = vunpack.c.h.b16 %v1084
  %v1184 = vunpack.c.l.b16 %v1085
  %v1185 = vunpack.c.h.b16 %v1085
  %v1186 = vunpack.c.l.b16 %v1086
  %v1187 = vunpack.c.h.b16 %v1086
  %v1188 = vunpack.c.l.b16 %v1087
  %v1189 = vunpack.c.h.b16 %v1087
  %v1190 = vunpack.c.l.b16 %v1088
  %v1191 = vunpack.c.h.b16 %v1088
  %v1192 = vunpack.c.l.b16 %v1089
  %v1193 = vunpack.c.h.b16 %v1089
  %v1194 = vunpack.c.l.b16 %v1090
  %v1195 = vunpack.c.h.b16 %v1090
  %v1196 = vunpack.c.l.b16 %v1091
  %v1197 = vunpack.c.h.b16 %v1091
  %v1198 = vunpack.c.l.b16 %v1092
  %v1199 = vunpack.c.h.b16 %v1092
  %v1200 = vunpack.c.l.b16 %v1093
  %v1201 = vunpack.c.h.b16 %v1093
  %v1202 = vpack.c.b16 %v1140, %v1138
  %v1203 = vpack.c.b16 %v1141, %v1139
  %v1204 = vpack.c.b16 %v1144, %v1142
  %v1205 = vpack.c.b16 %v1145, %v1143
  %v1206 = vpack.c.b16 %v1148, %v1146
  %v1207 = vpack.c.b16 %v1149, %v1147
  %v1208 = vpack.c.b16 %v1152, %v1150
  %v1209 = vpack.c.b16 %v1153, %v1151
  %v1210 = vpack.c.b16 %v1156, %v1154
  %v1211 = vpack.c.b16 %v1157, %v1155
  %v1212 = vpack.c.b16 %v1160, %v1158
  %v1213 = vpack.c.b16 %v1161, %v1159
  %v1214 = vpack.c.b16 %v1164, %v1162
  %v1215 = vpack.c.b16 %v1165, %v1163
  %v1216 = vpack.c.b16 %v1168, %v1166
  %v1217 = vpack.c.b16 %v1169, %v1167
  %v1218 = vpack.c.b16 %v1172, %v1170
  %v1219 = vpack.c.b16 %v1173, %v1171
  %v1220 = vpack.c.b16 %v1176, %v1174
  %v1221 = vpack.c.b16 %v1177, %v1175
  %v1222 = vpack.c.b16 %v1180, %v1178
  %v1223 = vpack.c.b16 %v1181, %v1179
  %v1224 = vpack.c.b16 %v1184, %v1182
  %v1225 = vpack.c.b16 %v1185, %v1183
  %v1226 = vpack.c.b16 %v1188, %v1186
  %v1227 = vpack.c.b16 %v1189, %v1187
  %v1228 = vpack.c.b16 %v1192, %v1190
  %v1229 = vpack.c.b16 %v1193, %v1191
  %v1230 = vpack.c.b16 %v1196, %v1194
  %v1231 = vpack.c.b16 %v1197, %v1195
  %v1232 = vpack.c.b16 %v1200, %v1198
  %v1233 = vpack.c.b16 %v1201, %v1199
  %1266 = vmatprep.subr.bf16.mxu0 %v1217
  %1267 = vmatpush1.bf16.msra.mxu0 %v1216
  %1268 = vmatprep.subr.bf16.mxu0 %v1215
  %1269 = vmatpush1.bf16.msra.mxu0 %v1214
  %1270 = vmatprep.subr.bf16.mxu0 %v1213
  %1271 = vmatpush1.bf16.msra.mxu0 %v1212
  %1272 = vmatprep.subr.bf16.mxu0 %v1211
  %1273 = vmatpush1.bf16.msra.mxu0 %v1210
  %1274 = vmatprep.subr.bf16.mxu0 %v1209
  %1275 = vmatpush1.bf16.msra.mxu0 %v1208
  %1276 = vmatprep.subr.bf16.mxu0 %v1207
  %1277 = vmatpush1.bf16.msra.mxu0 %v1206
  %1278 = vmatprep.subr.bf16.mxu0 %v1205
  %1279 = vmatpush1.bf16.msra.mxu0 %v1204
  %1280 = vmatprep.subr.bf16.mxu0 %v1203
  %1281 = vmatpush1.bf16.msra.mxu0 %v1202
  %1282 = vmatprep.subr.bf16.mxu0 %v1233
  %1283 = vmatpush2.bf16.msra.mxu0 %v1232
  %1284 = vmatprep.subr.bf16.mxu0 %v1231
  %1285 = vmatpush2.bf16.msra.mxu0 %v1230
  %1286 = vmatprep.subr.bf16.mxu0 %v1229
  %1287 = vmatpush2.bf16.msra.mxu0 %v1228
  %1288 = vmatprep.subr.bf16.mxu0 %v1227
  %1289 = vmatpush2.bf16.msra.mxu0 %v1226
  %1290 = vmatprep.subr.bf16.mxu0 %v1225
  %1291 = vmatpush2.bf16.msra.mxu0 %v1224
  %1292 = vmatprep.subr.bf16.mxu0 %v1223
  %1293 = vmatpush2.bf16.msra.mxu0 %v1222
  %1294 = vmatprep.subr.bf16.mxu0 %v1221
  %1295 = vmatpush2.bf16.msra.mxu0 %v1220
  %1296 = vmatprep.subr.bf16.mxu0 %v1219
  %1297 = vmatpush2.bf16.msra.mxu0 %v1218
  %1298 = vmatprep.mubr.bf16.mxu0 %v1061
  %1299 = vmatmul.mubr.bf16.gmra.mxu0 %v1060
  %v1300 = vpop.f32.mrf.mxu0
  %v1301 = vadd.f32 %v1099, %v1300
  %v1302 = vpop.f32.mrf.mxu0
  %v1303 = vadd.f32 %v1103, %v1302
  %v1304 = vpop.f32.mrf.mxu0
  %v1305 = vadd.f32 %v1099, %v1304
  %v1306 = vpop.f32.mrf.mxu0
  %v1307 = vadd.f32 %v1103, %v1306
  %1308 = vdwg.mxu0
  %1309 = vst [vmem:[%s15] sm:$0xff] %v1301
  %1310 = vst [vmem:[%s15 + $0x8] sm:$0xff] %v1303
  %1311 = vst [vmem:[%s15 + $0x10] sm:$0xff] %v1305
  %1312 = vst [vmem:[%s15 + $0x18] sm:$0xff] %v1307
  %v1313 = vld [vmem:[%s1] sm:$0xff]
  %v1314 = vld [vmem:[%s1 + $0x8] sm:$0xff]
  %v1315 = vmul.f32 %v1303, 0.5
  %v1316 = vmul.f32 %v1307, 0.5
  %v1317 = vmul.f32 %v1315, 1.442695
  %v1318 = vpow.pop %v1317
  %v1319 = vmul.f32 %v1316, 1.442695
  %v1320 = vpow.pop %v1319
  %v1321 = vmul.f32 %v1313, %v1318
  %v1322 = vmul.f32 %v1314, %v1320
  %v1323 = vadd.f32 %v1301, %v1321
  %v1324 = vadd.f32 %v1305, %v1322
  %v1325 = vpack.c.bf16 %v1324, %v1323
  %v1326 = vld [vmem:[%s8] sm:$0xff]
  %v1327 = vld [vmem:[%s8 + $0x8] sm:$0xff]
  %v1328 = vld [vmem:[%s8 + $0x10] sm:$0xff]
  %v1329 = vld [vmem:[%s8 + $0x18] sm:$0xff]
  %v1330 = vld [vmem:[%s8 + $0x20] sm:$0xff]
  %v1331 = vld [vmem:[%s8 + $0x28] sm:$0xff]
  %v1332 = vld [vmem:[%s8 + $0x30] sm:$0xff]
  %v1333 = vld [vmem:[%s8 + $0x38] sm:$0xff]
  %v1334 = vld [vmem:[%s8 + $0x40] sm:$0xff]
  %v1335 = vld [vmem:[%s8 + $0x48] sm:$0xff]
  %v1336 = vld [vmem:[%s8 + $0x50] sm:$0xff]
  %v1337 = vld [vmem:[%s8 + $0x58] sm:$0xff]
  %v1338 = vld [vmem:[%s8 + $0x60] sm:$0xff]
  %v1339 = vld [vmem:[%s8 + $0x68] sm:$0xff]
  %v1340 = vld [vmem:[%s8 + $0x70] sm:$0xff]
  %v1341 = vld [vmem:[%s8 + $0x78] sm:$0xff]
  %v1342 = vld [vmem:[%s9] sm:$0x3]
  %v1344 = vlaneseq
  %v1345 = vshrl.u32 %v1344, 7
  %v1346 = vsub.s32 0, %v1345
  %v1347 = vrot.slane %v1342, %v1346
  %v1348 = vlaneseq
  %v1349 = vshrl.u32 %v1348, 7
  %v1350 = vsub.s32 1, %v1349
  %v1351 = vrot.slane %v1342, %v1350
  %v1370 = vunpack.c.l.b16 %v1326
  %v1371 = vunpack.c.h.b16 %v1326
  %v1372 = vunpack.c.l.b16 %v1327
  %v1373 = vunpack.c.h.b16 %v1327
  %v1374 = vunpack.c.l.b16 %v1328
  %v1375 = vunpack.c.h.b16 %v1328
  %v1376 = vunpack.c.l.b16 %v1329
  %v1377 = vunpack.c.h.b16 %v1329
  %v1378 = vunpack.c.l.b16 %v1330
  %v1379 = vunpack.c.h.b16 %v1330
  %v1380 = vunpack.c.l.b16 %v1331
  %v1381 = vunpack.c.h.b16 %v1331
  %v1382 = vunpack.c.l.b16 %v1332
  %v1383 = vunpack.c.h.b16 %v1332
  %v1384 = vunpack.c.l.b16 %v1333
  %v1385 = vunpack.c.h.b16 %v1333
  %v1386 = vunpack.c.l.b16 %v1334
  %v1387 = vunpack.c.h.b16 %v1334
  %v1388 = vunpack.c.l.b16 %v1335
  %v1389 = vunpack.c.h.b16 %v1335
  %v1390 = vunpack.c.l.b16 %v1336
  %v1391 = vunpack.c.h.b16 %v1336
  %v1392 = vunpack.c.l.b16 %v1337
  %v1393 = vunpack.c.h.b16 %v1337
  %v1394 = vunpack.c.l.b16 %v1338
  %v1395 = vunpack.c.h.b16 %v1338
  %v1396 = vunpack.c.l.b16 %v1339
  %v1397 = vunpack.c.h.b16 %v1339
  %v1398 = vunpack.c.l.b16 %v1340
  %v1399 = vunpack.c.h.b16 %v1340
  %v1400 = vunpack.c.l.b16 %v1341
  %v1401 = vunpack.c.h.b16 %v1341
  %v1402 = vpack.c.b16 %v1372, %v1370
  %v1403 = vpack.c.b16 %v1373, %v1371
  %v1404 = vpack.c.b16 %v1376, %v1374
  %v1405 = vpack.c.b16 %v1377, %v1375
  %v1406 = vpack.c.b16 %v1380, %v1378
  %v1407 = vpack.c.b16 %v1381, %v1379
  %v1408 = vpack.c.b16 %v1384, %v1382
  %v1409 = vpack.c.b16 %v1385, %v1383
  %v1410 = vpack.c.b16 %v1388, %v1386
  %v1411 = vpack.c.b16 %v1389, %v1387
  %v1412 = vpack.c.b16 %v1392, %v1390
  %v1413 = vpack.c.b16 %v1393, %v1391
  %v1414 = vpack.c.b16 %v1396, %v1394
  %v1415 = vpack.c.b16 %v1397, %v1395
  %v1416 = vpack.c.b16 %v1400, %v1398
  %v1417 = vpack.c.b16 %v1401, %v1399
  %1434 = vmatprep.subr.bf16.mxu0 %v1417
  %1435 = vmatpush1.bf16.msra.mxu0 %v1416
  %1436 = vmatprep.subr.bf16.mxu0 %v1415
  %1437 = vmatpush1.bf16.msra.mxu0 %v1414
  %1438 = vmatprep.subr.bf16.mxu0 %v1413
  %1439 = vmatpush1.bf16.msra.mxu0 %v1412
  %1440 = vmatprep.subr.bf16.mxu0 %v1411
  %1441 = vmatpush1.bf16.msra.mxu0 %v1410
  %1442 = vmatprep.subr.bf16.mxu0 %v1409
  %1443 = vmatpush1.bf16.msra.mxu0 %v1408
  %1444 = vmatprep.subr.bf16.mxu0 %v1407
  %1445 = vmatpush1.bf16.msra.mxu0 %v1406
  %1446 = vmatprep.subr.bf16.mxu0 %v1405
  %1447 = vmatpush1.bf16.msra.mxu0 %v1404
  %1448 = vmatprep.subr.bf16.mxu0 %v1403
  %1449 = vmatpush1.bf16.msra.mxu0 %v1402
  %1450 = vmatprep.subr.bf16.mxu0 0
  %1451 = vmatpush2.bf16.msra.mxu0 0
  %1452 = vmatprep.subr.bf16.mxu0 0
  %1453 = vmatpush2.bf16.msra.mxu0 0
  %1454 = vmatprep.subr.bf16.mxu0 0
  %1455 = vmatpush2.bf16.msra.mxu0 0
  %1456 = vmatprep.subr.bf16.mxu0 0
  %1457 = vmatpush2.bf16.msra.mxu0 0
  %1458 = vmatprep.subr.bf16.mxu0 0
  %1459 = vmatpush2.bf16.msra.mxu0 0
  %1460 = vmatprep.subr.bf16.mxu0 0
  %1461 = vmatpush2.bf16.msra.mxu0 0
  %1462 = vmatprep.subr.bf16.mxu0 0
  %1463 = vmatpush2.bf16.msra.mxu0 0
  %1464 = vmatprep.subr.bf16.mxu0 0
  %1465 = vmatpush2.bf16.msra.mxu0 0
  %1466 = vmatprep.mubr.bf16.mxu0 0
  %1467 = vmatmul.mubr.bf16.gmra.mxu0 %v1325
  %v1468 = vpop.f32.mrf.mxu0
  %v1469 = vadd.f32 %v1347, %v1468
  %v1470 = vpop.f32.mrf.mxu0
  %v1471 = vadd.f32 %v1351, %v1470
  %v1472 = vpop.f32.mrf.mxu0
  %v1473 = vadd.f32 %v1347, %v1472
  %v1474 = vpop.f32.mrf.mxu0
  %v1475 = vadd.f32 %v1351, %v1474
  %1476 = vdwg.mxu0
  %v1477 = vmax.f32 %v1469, 0.0
  %v1478 = vmax.f32 %v1471, 0.0
  %v1479 = vmax.f32 %v1473, 0.0
  %v1480 = vmax.f32 %v1475, 0.0
  %v1481 = vpack.c.bf16 %v1479, %v1477
  %v1482 = vpack.c.bf16 %v1480, %v1478
  %v1483 = vld [vmem:[%s10] sm:$0xff]
  %v1484 = vld [vmem:[%s10 + $0x8] sm:$0xff]
  %v1485 = vld [vmem:[%s10 + $0x10] sm:$0xff]
  %v1486 = vld [vmem:[%s10 + $0x18] sm:$0xff]
  %v1487 = vld [vmem:[%s10 + $0x20] sm:$0xff]
  %v1488 = vld [vmem:[%s10 + $0x28] sm:$0xff]
  %v1489 = vld [vmem:[%s10 + $0x30] sm:$0xff]
  %v1490 = vld [vmem:[%s10 + $0x38] sm:$0xff]
  %v1491 = vld [vmem:[%s10 + $0x40] sm:$0xff]
  %v1492 = vld [vmem:[%s10 + $0x48] sm:$0xff]
  %v1493 = vld [vmem:[%s10 + $0x50] sm:$0xff]
  %v1494 = vld [vmem:[%s10 + $0x58] sm:$0xff]
  %v1495 = vld [vmem:[%s10 + $0x60] sm:$0xff]
  %v1496 = vld [vmem:[%s10 + $0x68] sm:$0xff]
  %v1497 = vld [vmem:[%s10 + $0x70] sm:$0xff]
  %v1498 = vld [vmem:[%s10 + $0x78] sm:$0xff]
  %v1499 = vld [vmem:[%s10 + $0x80] sm:$0xff]
  %v1500 = vld [vmem:[%s10 + $0x88] sm:$0xff]
  %v1501 = vld [vmem:[%s10 + $0x90] sm:$0xff]
  %v1502 = vld [vmem:[%s10 + $0x98] sm:$0xff]
  %v1503 = vld [vmem:[%s10 + $0xa0] sm:$0xff]
  %v1504 = vld [vmem:[%s10 + $0xa8] sm:$0xff]
  %v1505 = vld [vmem:[%s10 + $0xb0] sm:$0xff]
  %v1506 = vld [vmem:[%s10 + $0xb8] sm:$0xff]
  %v1507 = vld [vmem:[%s10 + $0xc0] sm:$0xff]
  %v1508 = vld [vmem:[%s10 + $0xc8] sm:$0xff]
  %v1509 = vld [vmem:[%s10 + $0xd0] sm:$0xff]
  %v1510 = vld [vmem:[%s10 + $0xd8] sm:$0xff]
  %v1511 = vld [vmem:[%s10 + $0xe0] sm:$0xff]
  %v1512 = vld [vmem:[%s10 + $0xe8] sm:$0xff]
  %v1513 = vld [vmem:[%s10 + $0xf0] sm:$0xff]
  %v1514 = vld [vmem:[%s10 + $0xf8] sm:$0xff]
  %v1515 = vld [vmem:[%s11] sm:$0x3]
  %v1517 = vlaneseq
  %v1518 = vshrl.u32 %v1517, 7
  %v1519 = vsub.s32 0, %v1518
  %v1520 = vrot.slane %v1515, %v1519
  %v1521 = vlaneseq
  %v1522 = vshrl.u32 %v1521, 7
  %v1523 = vsub.s32 1, %v1522
  %v1524 = vrot.slane %v1515, %v1523
  %v1559 = vunpack.c.l.b16 %v1483
  %v1560 = vunpack.c.h.b16 %v1483
  %v1561 = vunpack.c.l.b16 %v1484
  %v1562 = vunpack.c.h.b16 %v1484
  %v1563 = vunpack.c.l.b16 %v1485
  %v1564 = vunpack.c.h.b16 %v1485
  %v1565 = vunpack.c.l.b16 %v1486
  %v1566 = vunpack.c.h.b16 %v1486
  %v1567 = vunpack.c.l.b16 %v1487
  %v1568 = vunpack.c.h.b16 %v1487
  %v1569 = vunpack.c.l.b16 %v1488
  %v1570 = vunpack.c.h.b16 %v1488
  %v1571 = vunpack.c.l.b16 %v1489
  %v1572 = vunpack.c.h.b16 %v1489
  %v1573 = vunpack.c.l.b16 %v1490
  %v1574 = vunpack.c.h.b16 %v1490
  %v1575 = vunpack.c.l.b16 %v1491
  %v1576 = vunpack.c.h.b16 %v1491
  %v1577 = vunpack.c.l.b16 %v1492
  %v1578 = vunpack.c.h.b16 %v1492
  %v1579 = vunpack.c.l.b16 %v1493
  %v1580 = vunpack.c.h.b16 %v1493
  %v1581 = vunpack.c.l.b16 %v1494
  %v1582 = vunpack.c.h.b16 %v1494
  %v1583 = vunpack.c.l.b16 %v1495
  %v1584 = vunpack.c.h.b16 %v1495
  %v1585 = vunpack.c.l.b16 %v1496
  %v1586 = vunpack.c.h.b16 %v1496
  %v1587 = vunpack.c.l.b16 %v1497
  %v1588 = vunpack.c.h.b16 %v1497
  %v1589 = vunpack.c.l.b16 %v1498
  %v1590 = vunpack.c.h.b16 %v1498
  %v1591 = vunpack.c.l.b16 %v1499
  %v1592 = vunpack.c.h.b16 %v1499
  %v1593 = vunpack.c.l.b16 %v1500
  %v1594 = vunpack.c.h.b16 %v1500
  %v1595 = vunpack.c.l.b16 %v1501
  %v1596 = vunpack.c.h.b16 %v1501
  %v1597 = vunpack.c.l.b16 %v1502
  %v1598 = vunpack.c.h.b16 %v1502
  %v1599 = vunpack.c.l.b16 %v1503
  %v1600 = vunpack.c.h.b16 %v1503
  %v1601 = vunpack.c.l.b16 %v1504
  %v1602 = vunpack.c.h.b16 %v1504
  %v1603 = vunpack.c.l.b16 %v1505
  %v1604 = vunpack.c.h.b16 %v1505
  %v1605 = vunpack.c.l.b16 %v1506
  %v1606 = vunpack.c.h.b16 %v1506
  %v1607 = vunpack.c.l.b16 %v1507
  %v1608 = vunpack.c.h.b16 %v1507
  %v1609 = vunpack.c.l.b16 %v1508
  %v1610 = vunpack.c.h.b16 %v1508
  %v1611 = vunpack.c.l.b16 %v1509
  %v1612 = vunpack.c.h.b16 %v1509
  %v1613 = vunpack.c.l.b16 %v1510
  %v1614 = vunpack.c.h.b16 %v1510
  %v1615 = vunpack.c.l.b16 %v1511
  %v1616 = vunpack.c.h.b16 %v1511
  %v1617 = vunpack.c.l.b16 %v1512
  %v1618 = vunpack.c.h.b16 %v1512
  %v1619 = vunpack.c.l.b16 %v1513
  %v1620 = vunpack.c.h.b16 %v1513
  %v1621 = vunpack.c.l.b16 %v1514
  %v1622 = vunpack.c.h.b16 %v1514
  %v1623 = vpack.c.b16 %v1561, %v1559
  %v1624 = vpack.c.b16 %v1562, %v1560
  %v1625 = vpack.c.b16 %v1565, %v1563
  %v1626 = vpack.c.b16 %v1566, %v1564
  %v1627 = vpack.c.b16 %v1569, %v1567
  %v1628 = vpack.c.b16 %v1570, %v1568
  %v1629 = vpack.c.b16 %v1573, %v1571
  %v1630 = vpack.c.b16 %v1574, %v1572
  %v1631 = vpack.c.b16 %v1577, %v1575
  %v1632 = vpack.c.b16 %v1578, %v1576
  %v1633 = vpack.c.b16 %v1581, %v1579
  %v1634 = vpack.c.b16 %v1582, %v1580
  %v1635 = vpack.c.b16 %v1585, %v1583
  %v1636 = vpack.c.b16 %v1586, %v1584
  %v1637 = vpack.c.b16 %v1589, %v1587
  %v1638 = vpack.c.b16 %v1590, %v1588
  %v1639 = vpack.c.b16 %v1593, %v1591
  %v1640 = vpack.c.b16 %v1594, %v1592
  %v1641 = vpack.c.b16 %v1597, %v1595
  %v1642 = vpack.c.b16 %v1598, %v1596
  %v1643 = vpack.c.b16 %v1601, %v1599
  %v1644 = vpack.c.b16 %v1602, %v1600
  %v1645 = vpack.c.b16 %v1605, %v1603
  %v1646 = vpack.c.b16 %v1606, %v1604
  %v1647 = vpack.c.b16 %v1609, %v1607
  %v1648 = vpack.c.b16 %v1610, %v1608
  %v1649 = vpack.c.b16 %v1613, %v1611
  %v1650 = vpack.c.b16 %v1614, %v1612
  %v1651 = vpack.c.b16 %v1617, %v1615
  %v1652 = vpack.c.b16 %v1618, %v1616
  %v1653 = vpack.c.b16 %v1621, %v1619
  %v1654 = vpack.c.b16 %v1622, %v1620
  %1687 = vmatprep.subr.bf16.mxu0 %v1638
  %1688 = vmatpush1.bf16.msra.mxu0 %v1637
  %1689 = vmatprep.subr.bf16.mxu0 %v1636
  %1690 = vmatpush1.bf16.msra.mxu0 %v1635
  %1691 = vmatprep.subr.bf16.mxu0 %v1634
  %1692 = vmatpush1.bf16.msra.mxu0 %v1633
  %1693 = vmatprep.subr.bf16.mxu0 %v1632
  %1694 = vmatpush1.bf16.msra.mxu0 %v1631
  %1695 = vmatprep.subr.bf16.mxu0 %v1630
  %1696 = vmatpush1.bf16.msra.mxu0 %v1629
  %1697 = vmatprep.subr.bf16.mxu0 %v1628
  %1698 = vmatpush1.bf16.msra.mxu0 %v1627
  %1699 = vmatprep.subr.bf16.mxu0 %v1626
  %1700 = vmatpush1.bf16.msra.mxu0 %v1625
  %1701 = vmatprep.subr.bf16.mxu0 %v1624
  %1702 = vmatpush1.bf16.msra.mxu0 %v1623
  %1703 = vmatprep.subr.bf16.mxu0 %v1654
  %1704 = vmatpush2.bf16.msra.mxu0 %v1653
  %1705 = vmatprep.subr.bf16.mxu0 %v1652
  %1706 = vmatpush2.bf16.msra.mxu0 %v1651
  %1707 = vmatprep.subr.bf16.mxu0 %v1650
  %1708 = vmatpush2.bf16.msra.mxu0 %v1649
  %1709 = vmatprep.subr.bf16.mxu0 %v1648
  %1710 = vmatpush2.bf16.msra.mxu0 %v1647
  %1711 = vmatprep.subr.bf16.mxu0 %v1646
  %1712 = vmatpush2.bf16.msra.mxu0 %v1645
  %1713 = vmatprep.subr.bf16.mxu0 %v1644
  %1714 = vmatpush2.bf16.msra.mxu0 %v1643
  %1715 = vmatprep.subr.bf16.mxu0 %v1642
  %1716 = vmatpush2.bf16.msra.mxu0 %v1641
  %1717 = vmatprep.subr.bf16.mxu0 %v1640
  %1718 = vmatpush2.bf16.msra.mxu0 %v1639
  %1719 = vmatprep.mubr.bf16.mxu0 %v1482
  %1720 = vmatmul.mubr.bf16.gmra.mxu0 %v1481
  %v1721 = vpop.f32.mrf.mxu0
  %v1722 = vadd.f32 %v1520, %v1721
  %v1723 = vpop.f32.mrf.mxu0
  %v1724 = vadd.f32 %v1524, %v1723
  %v1725 = vpop.f32.mrf.mxu0
  %v1726 = vadd.f32 %v1520, %v1725
  %v1727 = vpop.f32.mrf.mxu0
  %v1728 = vadd.f32 %v1524, %v1727
  %1729 = vdwg.mxu0
  %v1730 = vmax.f32 %v1722, 0.0
  %v1731 = vmax.f32 %v1724, 0.0
  %v1732 = vmax.f32 %v1726, 0.0
  %v1733 = vmax.f32 %v1728, 0.0
  %v1734 = vpack.c.bf16 %v1732, %v1730
  %v1735 = vpack.c.bf16 %v1733, %v1731
  %v1736 = vld [vmem:[%s12] sm:$0xff]
  %v1737 = vld [vmem:[%s12 + $0x8] sm:$0xff]
  %v1738 = vld [vmem:[%s12 + $0x10] sm:$0xff]
  %v1739 = vld [vmem:[%s12 + $0x18] sm:$0xff]
  %v1740 = vld [vmem:[%s12 + $0x20] sm:$0xff]
  %v1741 = vld [vmem:[%s12 + $0x28] sm:$0xff]
  %v1742 = vld [vmem:[%s12 + $0x30] sm:$0xff]
  %v1743 = vld [vmem:[%s12 + $0x38] sm:$0xff]
  %v1744 = vld [vmem:[%s12 + $0x40] sm:$0xff]
  %v1745 = vld [vmem:[%s12 + $0x48] sm:$0xff]
  %v1746 = vld [vmem:[%s12 + $0x50] sm:$0xff]
  %v1747 = vld [vmem:[%s12 + $0x58] sm:$0xff]
  %v1748 = vld [vmem:[%s12 + $0x60] sm:$0xff]
  %v1749 = vld [vmem:[%s12 + $0x68] sm:$0xff]
  %v1750 = vld [vmem:[%s12 + $0x70] sm:$0xff]
  %v1751 = vld [vmem:[%s12 + $0x78] sm:$0xff]
  %v1752 = vld [vmem:[%s12 + $0x80] sm:$0xff]
  %v1753 = vld [vmem:[%s12 + $0x88] sm:$0xff]
  %v1754 = vld [vmem:[%s12 + $0x90] sm:$0xff]
  %v1755 = vld [vmem:[%s12 + $0x98] sm:$0xff]
  %v1756 = vld [vmem:[%s12 + $0xa0] sm:$0xff]
  %v1757 = vld [vmem:[%s12 + $0xa8] sm:$0xff]
  %v1758 = vld [vmem:[%s12 + $0xb0] sm:$0xff]
  %v1759 = vld [vmem:[%s12 + $0xb8] sm:$0xff]
  %v1760 = vld [vmem:[%s12 + $0xc0] sm:$0xff]
  %v1761 = vld [vmem:[%s12 + $0xc8] sm:$0xff]
  %v1762 = vld [vmem:[%s12 + $0xd0] sm:$0xff]
  %v1763 = vld [vmem:[%s12 + $0xd8] sm:$0xff]
  %v1764 = vld [vmem:[%s12 + $0xe0] sm:$0xff]
  %v1765 = vld [vmem:[%s12 + $0xe8] sm:$0xff]
  %v1766 = vld [vmem:[%s12 + $0xf0] sm:$0xff]
  %v1767 = vld [vmem:[%s12 + $0xf8] sm:$0xff]
  %v1768 = vld [vmem:[%s12 + $0x100] sm:$0xff]
  %v1769 = vld [vmem:[%s12 + $0x108] sm:$0xff]
  %v1770 = vld [vmem:[%s12 + $0x110] sm:$0xff]
  %v1771 = vld [vmem:[%s12 + $0x118] sm:$0xff]
  %v1772 = vld [vmem:[%s12 + $0x120] sm:$0xff]
  %v1773 = vld [vmem:[%s12 + $0x128] sm:$0xff]
  %v1774 = vld [vmem:[%s12 + $0x130] sm:$0xff]
  %v1775 = vld [vmem:[%s12 + $0x138] sm:$0xff]
  %v1776 = vld [vmem:[%s12 + $0x140] sm:$0xff]
  %v1777 = vld [vmem:[%s12 + $0x148] sm:$0xff]
  %v1778 = vld [vmem:[%s12 + $0x150] sm:$0xff]
  %v1779 = vld [vmem:[%s12 + $0x158] sm:$0xff]
  %v1780 = vld [vmem:[%s12 + $0x160] sm:$0xff]
  %v1781 = vld [vmem:[%s12 + $0x168] sm:$0xff]
  %v1782 = vld [vmem:[%s12 + $0x170] sm:$0xff]
  %v1783 = vld [vmem:[%s12 + $0x178] sm:$0xff]
  %v1784 = vld [vmem:[%s12 + $0x180] sm:$0xff]
  %v1785 = vld [vmem:[%s12 + $0x188] sm:$0xff]
  %v1786 = vld [vmem:[%s12 + $0x190] sm:$0xff]
  %v1787 = vld [vmem:[%s12 + $0x198] sm:$0xff]
  %v1788 = vld [vmem:[%s12 + $0x1a0] sm:$0xff]
  %v1789 = vld [vmem:[%s12 + $0x1a8] sm:$0xff]
  %v1790 = vld [vmem:[%s12 + $0x1b0] sm:$0xff]
  %v1791 = vld [vmem:[%s12 + $0x1b8] sm:$0xff]
  %v1792 = vld [vmem:[%s12 + $0x1c0] sm:$0xff]
  %v1793 = vld [vmem:[%s12 + $0x1c8] sm:$0xff]
  %v1794 = vld [vmem:[%s12 + $0x1d0] sm:$0xff]
  %v1795 = vld [vmem:[%s12 + $0x1d8] sm:$0xff]
  %v1796 = vld [vmem:[%s12 + $0x1e0] sm:$0xff]
  %v1797 = vld [vmem:[%s12 + $0x1e8] sm:$0xff]
  %v1798 = vld [vmem:[%s12 + $0x1f0] sm:$0xff]
  %v1799 = vld [vmem:[%s12 + $0x1f8] sm:$0xff]
  %v1800 = vld [vmem:[%s12 + $0x200] sm:$0xff]
  %v1801 = vld [vmem:[%s12 + $0x208] sm:$0xff]
  %v1802 = vld [vmem:[%s12 + $0x210] sm:$0xff]
  %v1803 = vld [vmem:[%s12 + $0x218] sm:$0xff]
  %v1804 = vld [vmem:[%s12 + $0x220] sm:$0xff]
  %v1805 = vld [vmem:[%s12 + $0x228] sm:$0xff]
  %v1806 = vld [vmem:[%s12 + $0x230] sm:$0xff]
  %v1807 = vld [vmem:[%s12 + $0x238] sm:$0xff]
  %v1808 = vld [vmem:[%s12 + $0x240] sm:$0xff]
  %v1809 = vld [vmem:[%s12 + $0x248] sm:$0xff]
  %v1810 = vld [vmem:[%s12 + $0x250] sm:$0xff]
  %v1811 = vld [vmem:[%s12 + $0x258] sm:$0xff]
  %v1812 = vld [vmem:[%s12 + $0x260] sm:$0xff]
  %v1813 = vld [vmem:[%s12 + $0x268] sm:$0xff]
  %v1814 = vld [vmem:[%s12 + $0x270] sm:$0xff]
  %v1815 = vld [vmem:[%s12 + $0x278] sm:$0xff]
  %v1816 = vld [vmem:[%s12 + $0x280] sm:$0xff]
  %v1817 = vld [vmem:[%s12 + $0x288] sm:$0xff]
  %v1818 = vld [vmem:[%s12 + $0x290] sm:$0xff]
  %v1819 = vld [vmem:[%s12 + $0x298] sm:$0xff]
  %v1820 = vld [vmem:[%s12 + $0x2a0] sm:$0xff]
  %v1821 = vld [vmem:[%s12 + $0x2a8] sm:$0xff]
  %v1822 = vld [vmem:[%s12 + $0x2b0] sm:$0xff]
  %v1823 = vld [vmem:[%s12 + $0x2b8] sm:$0xff]
  %v1824 = vld [vmem:[%s12 + $0x2c0] sm:$0xff]
  %v1825 = vld [vmem:[%s12 + $0x2c8] sm:$0xff]
  %v1826 = vld [vmem:[%s12 + $0x2d0] sm:$0xff]
  %v1827 = vld [vmem:[%s12 + $0x2d8] sm:$0xff]
  %v1828 = vld [vmem:[%s12 + $0x2e0] sm:$0xff]
  %v1829 = vld [vmem:[%s12 + $0x2e8] sm:$0xff]
  %v1830 = vld [vmem:[%s12 + $0x2f0] sm:$0xff]
  %v1831 = vld [vmem:[%s12 + $0x2f8] sm:$0xff]
  %v1832 = vld [vmem:[%s13] sm:$0x3f]
  %v1834 = vlaneseq
  %v1835 = vshrl.u32 %v1834, 7
  %v1836 = vsub.s32 0, %v1835
  %v1837 = vrot.slane %v1832, %v1836
  %v1838 = vlaneseq
  %v1839 = vshrl.u32 %v1838, 7
  %v1840 = vsub.s32 1, %v1839
  %v1841 = vrot.slane %v1832, %v1840
  %v1842 = vlaneseq
  %v1843 = vshrl.u32 %v1842, 7
  %v1844 = vsub.s32 2, %v1843
  %v1845 = vrot.slane %v1832, %v1844
  %v1846 = vlaneseq
  %v1847 = vshrl.u32 %v1846, 7
  %v1848 = vsub.s32 3, %v1847
  %v1849 = vrot.slane %v1832, %v1848
  %v1850 = vlaneseq
  %v1851 = vshrl.u32 %v1850, 7
  %v1852 = vsub.s32 4, %v1851
  %v1853 = vrot.slane %v1832, %v1852
  %v1854 = vlaneseq
  %v1855 = vshrl.u32 %v1854, 7
  %v1856 = vsub.s32 5, %v1855
  %v1857 = vrot.slane %v1832, %v1856
  %v1960 = vunpack.c.l.b16 %v1736
  %v1961 = vunpack.c.h.b16 %v1736
  %v1962 = vunpack.c.l.b16 %v1737
  %v1963 = vunpack.c.h.b16 %v1737
  %v1964 = vunpack.c.l.b16 %v1738
  %v1965 = vunpack.c.h.b16 %v1738
  %v1966 = vunpack.c.l.b16 %v1739
  %v1967 = vunpack.c.h.b16 %v1739
  %v1968 = vunpack.c.l.b16 %v1740
  %v1969 = vunpack.c.h.b16 %v1740
  %v1970 = vunpack.c.l.b16 %v1741
  %v1971 = vunpack.c.h.b16 %v1741
  %v1972 = vunpack.c.l.b16 %v1742
  %v1973 = vunpack.c.h.b16 %v1742
  %v1974 = vunpack.c.l.b16 %v1743
  %v1975 = vunpack.c.h.b16 %v1743
  %v1976 = vunpack.c.l.b16 %v1744
  %v1977 = vunpack.c.h.b16 %v1744
  %v1978 = vunpack.c.l.b16 %v1745
  %v1979 = vunpack.c.h.b16 %v1745
  %v1980 = vunpack.c.l.b16 %v1746
  %v1981 = vunpack.c.h.b16 %v1746
  %v1982 = vunpack.c.l.b16 %v1747
  %v1983 = vunpack.c.h.b16 %v1747
  %v1984 = vunpack.c.l.b16 %v1748
  %v1985 = vunpack.c.h.b16 %v1748
  %v1986 = vunpack.c.l.b16 %v1749
  %v1987 = vunpack.c.h.b16 %v1749
  %v1988 = vunpack.c.l.b16 %v1750
  %v1989 = vunpack.c.h.b16 %v1750
  %v1990 = vunpack.c.l.b16 %v1751
  %v1991 = vunpack.c.h.b16 %v1751
  %v1992 = vunpack.c.l.b16 %v1752
  %v1993 = vunpack.c.h.b16 %v1752
  %v1994 = vunpack.c.l.b16 %v1753
  %v1995 = vunpack.c.h.b16 %v1753
  %v1996 = vunpack.c.l.b16 %v1754
  %v1997 = vunpack.c.h.b16 %v1754
  %v1998 = vunpack.c.l.b16 %v1755
  %v1999 = vunpack.c.h.b16 %v1755
  %v2000 = vunpack.c.l.b16 %v1756
  %v2001 = vunpack.c.h.b16 %v1756
  %v2002 = vunpack.c.l.b16 %v1757
  %v2003 = vunpack.c.h.b16 %v1757
  %v2004 = vunpack.c.l.b16 %v1758
  %v2005 = vunpack.c.h.b16 %v1758
  %v2006 = vunpack.c.l.b16 %v1759
  %v2007 = vunpack.c.h.b16 %v1759
  %v2008 = vunpack.c.l.b16 %v1760
  %v2009 = vunpack.c.h.b16 %v1760
  %v2010 = vunpack.c.l.b16 %v1761
  %v2011 = vunpack.c.h.b16 %v1761
  %v2012 = vunpack.c.l.b16 %v1762
  %v2013 = vunpack.c.h.b16 %v1762
  %v2014 = vunpack.c.l.b16 %v1763
  %v2015 = vunpack.c.h.b16 %v1763
  %v2016 = vunpack.c.l.b16 %v1764
  %v2017 = vunpack.c.h.b16 %v1764
  %v2018 = vunpack.c.l.b16 %v1765
  %v2019 = vunpack.c.h.b16 %v1765
  %v2020 = vunpack.c.l.b16 %v1766
  %v2021 = vunpack.c.h.b16 %v1766
  %v2022 = vunpack.c.l.b16 %v1767
  %v2023 = vunpack.c.h.b16 %v1767
  %v2024 = vunpack.c.l.b16 %v1768
  %v2025 = vunpack.c.h.b16 %v1768
  %v2026 = vunpack.c.l.b16 %v1769
  %v2027 = vunpack.c.h.b16 %v1769
  %v2028 = vunpack.c.l.b16 %v1770
  %v2029 = vunpack.c.h.b16 %v1770
  %v2030 = vunpack.c.l.b16 %v1771
  %v2031 = vunpack.c.h.b16 %v1771
  %v2032 = vunpack.c.l.b16 %v1772
  %v2033 = vunpack.c.h.b16 %v1772
  %v2034 = vunpack.c.l.b16 %v1773
  %v2035 = vunpack.c.h.b16 %v1773
  %v2036 = vunpack.c.l.b16 %v1774
  %v2037 = vunpack.c.h.b16 %v1774
  %v2038 = vunpack.c.l.b16 %v1775
  %v2039 = vunpack.c.h.b16 %v1775
  %v2040 = vunpack.c.l.b16 %v1776
  %v2041 = vunpack.c.h.b16 %v1776
  %v2042 = vunpack.c.l.b16 %v1777
  %v2043 = vunpack.c.h.b16 %v1777
  %v2044 = vunpack.c.l.b16 %v1778
  %v2045 = vunpack.c.h.b16 %v1778
  %v2046 = vunpack.c.l.b16 %v1779
  %v2047 = vunpack.c.h.b16 %v1779
  %v2048 = vunpack.c.l.b16 %v1780
  %v2049 = vunpack.c.h.b16 %v1780
  %v2050 = vunpack.c.l.b16 %v1781
  %v2051 = vunpack.c.h.b16 %v1781
  %v2052 = vunpack.c.l.b16 %v1782
  %v2053 = vunpack.c.h.b16 %v1782
  %v2054 = vunpack.c.l.b16 %v1783
  %v2055 = vunpack.c.h.b16 %v1783
  %v2056 = vunpack.c.l.b16 %v1784
  %v2057 = vunpack.c.h.b16 %v1784
  %v2058 = vunpack.c.l.b16 %v1785
  %v2059 = vunpack.c.h.b16 %v1785
  %v2060 = vunpack.c.l.b16 %v1786
  %v2061 = vunpack.c.h.b16 %v1786
  %v2062 = vunpack.c.l.b16 %v1787
  %v2063 = vunpack.c.h.b16 %v1787
  %v2064 = vunpack.c.l.b16 %v1788
  %v2065 = vunpack.c.h.b16 %v1788
  %v2066 = vunpack.c.l.b16 %v1789
  %v2067 = vunpack.c.h.b16 %v1789
  %v2068 = vunpack.c.l.b16 %v1790
  %v2069 = vunpack.c.h.b16 %v1790
  %v2070 = vunpack.c.l.b16 %v1791
  %v2071 = vunpack.c.h.b16 %v1791
  %v2072 = vunpack.c.l.b16 %v1792
  %v2073 = vunpack.c.h.b16 %v1792
  %v2074 = vunpack.c.l.b16 %v1793
  %v2075 = vunpack.c.h.b16 %v1793
  %v2076 = vunpack.c.l.b16 %v1794
  %v2077 = vunpack.c.h.b16 %v1794
  %v2078 = vunpack.c.l.b16 %v1795
  %v2079 = vunpack.c.h.b16 %v1795
  %v2080 = vunpack.c.l.b16 %v1796
  %v2081 = vunpack.c.h.b16 %v1796
  %v2082 = vunpack.c.l.b16 %v1797
  %v2083 = vunpack.c.h.b16 %v1797
  %v2084 = vunpack.c.l.b16 %v1798
  %v2085 = vunpack.c.h.b16 %v1798
  %v2086 = vunpack.c.l.b16 %v1799
  %v2087 = vunpack.c.h.b16 %v1799
  %v2088 = vunpack.c.l.b16 %v1800
  %v2089 = vunpack.c.h.b16 %v1800
  %v2090 = vunpack.c.l.b16 %v1801
  %v2091 = vunpack.c.h.b16 %v1801
  %v2092 = vunpack.c.l.b16 %v1802
  %v2093 = vunpack.c.h.b16 %v1802
  %v2094 = vunpack.c.l.b16 %v1803
  %v2095 = vunpack.c.h.b16 %v1803
  %v2096 = vunpack.c.l.b16 %v1804
  %v2097 = vunpack.c.h.b16 %v1804
  %v2098 = vunpack.c.l.b16 %v1805
  %v2099 = vunpack.c.h.b16 %v1805
  %v2100 = vunpack.c.l.b16 %v1806
  %v2101 = vunpack.c.h.b16 %v1806
  %v2102 = vunpack.c.l.b16 %v1807
  %v2103 = vunpack.c.h.b16 %v1807
  %v2104 = vunpack.c.l.b16 %v1808
  %v2105 = vunpack.c.h.b16 %v1808
  %v2106 = vunpack.c.l.b16 %v1809
  %v2107 = vunpack.c.h.b16 %v1809
  %v2108 = vunpack.c.l.b16 %v1810
  %v2109 = vunpack.c.h.b16 %v1810
  %v2110 = vunpack.c.l.b16 %v1811
  %v2111 = vunpack.c.h.b16 %v1811
  %v2112 = vunpack.c.l.b16 %v1812
  %v2113 = vunpack.c.h.b16 %v1812
  %v2114 = vunpack.c.l.b16 %v1813
  %v2115 = vunpack.c.h.b16 %v1813
  %v2116 = vunpack.c.l.b16 %v1814
  %v2117 = vunpack.c.h.b16 %v1814
  %v2118 = vunpack.c.l.b16 %v1815
  %v2119 = vunpack.c.h.b16 %v1815
  %v2120 = vunpack.c.l.b16 %v1816
  %v2121 = vunpack.c.h.b16 %v1816
  %v2122 = vunpack.c.l.b16 %v1817
  %v2123 = vunpack.c.h.b16 %v1817
  %v2124 = vunpack.c.l.b16 %v1818
  %v2125 = vunpack.c.h.b16 %v1818
  %v2126 = vunpack.c.l.b16 %v1819
  %v2127 = vunpack.c.h.b16 %v1819
  %v2128 = vunpack.c.l.b16 %v1820
  %v2129 = vunpack.c.h.b16 %v1820
  %v2130 = vunpack.c.l.b16 %v1821
  %v2131 = vunpack.c.h.b16 %v1821
  %v2132 = vunpack.c.l.b16 %v1822
  %v2133 = vunpack.c.h.b16 %v1822
  %v2134 = vunpack.c.l.b16 %v1823
  %v2135 = vunpack.c.h.b16 %v1823
  %v2136 = vunpack.c.l.b16 %v1824
  %v2137 = vunpack.c.h.b16 %v1824
  %v2138 = vunpack.c.l.b16 %v1825
  %v2139 = vunpack.c.h.b16 %v1825
  %v2140 = vunpack.c.l.b16 %v1826
  %v2141 = vunpack.c.h.b16 %v1826
  %v2142 = vunpack.c.l.b16 %v1827
  %v2143 = vunpack.c.h.b16 %v1827
  %v2144 = vunpack.c.l.b16 %v1828
  %v2145 = vunpack.c.h.b16 %v1828
  %v2146 = vunpack.c.l.b16 %v1829
  %v2147 = vunpack.c.h.b16 %v1829
  %v2148 = vunpack.c.l.b16 %v1830
  %v2149 = vunpack.c.h.b16 %v1830
  %v2150 = vunpack.c.l.b16 %v1831
  %v2151 = vunpack.c.h.b16 %v1831
  %v2152 = vpack.c.b16 %v1966, %v1960
  %v2153 = vpack.c.b16 %v1967, %v1961
  %v2154 = vpack.c.b16 %v1968, %v1962
  %v2155 = vpack.c.b16 %v1969, %v1963
  %v2156 = vpack.c.b16 %v1970, %v1964
  %v2157 = vpack.c.b16 %v1971, %v1965
  %v2158 = vpack.c.b16 %v1978, %v1972
  %v2159 = vpack.c.b16 %v1979, %v1973
  %v2160 = vpack.c.b16 %v1980, %v1974
  %v2161 = vpack.c.b16 %v1981, %v1975
  %v2162 = vpack.c.b16 %v1982, %v1976
  %v2163 = vpack.c.b16 %v1983, %v1977
  %v2164 = vpack.c.b16 %v1990, %v1984
  %v2165 = vpack.c.b16 %v1991, %v1985
  %v2166 = vpack.c.b16 %v1992, %v1986
  %v2167 = vpack.c.b16 %v1993, %v1987
  %v2168 = vpack.c.b16 %v1994, %v1988
  %v2169 = vpack.c.b16 %v1995, %v1989
  %v2170 = vpack.c.b16 %v2002, %v1996
  %v2171 = vpack.c.b16 %v2003, %v1997
  %v2172 = vpack.c.b16 %v2004, %v1998
  %v2173 = vpack.c.b16 %v2005, %v1999
  %v2174 = vpack.c.b16 %v2006, %v2000
  %v2175 = vpack.c.b16 %v2007, %v2001
  %v2176 = vpack.c.b16 %v2014, %v2008
  %v2177 = vpack.c.b16 %v2015, %v2009
  %v2178 = vpack.c.b16 %v2016, %v2010
  %v2179 = vpack.c.b16 %v2017, %v2011
  %v2180 = vpack.c.b16 %v2018, %v2012
  %v2181 = vpack.c.b16 %v2019, %v2013
  %v2182 = vpack.c.b16 %v2026, %v2020
  %v2183 = vpack.c.b16 %v2027, %v2021
  %v2184 = vpack.c.b16 %v2028, %v2022
  %v2185 = vpack.c.b16 %v2029, %v2023
  %v2186 = vpack.c.b16 %v2030, %v2024
  %v2187 = vpack.c.b16 %v2031, %v2025
  %v2188 = vpack.c.b16 %v2038, %v2032
  %v2189 = vpack.c.b16 %v2039, %v2033
  %v2190 = vpack.c.b16 %v2040, %v2034
  %v2191 = vpack.c.b16 %v2041, %v2035
  %v2192 = vpack.c.b16 %v2042, %v2036
  %v2193 = vpack.c.b16 %v2043, %v2037
  %v2194 = vpack.c.b16 %v2050, %v2044
  %v2195 = vpack.c.b16 %v2051, %v2045
  %v2196 = vpack.c.b16 %v2052, %v2046
  %v2197 = vpack.c.b16 %v2053, %v2047
  %v2198 = vpack.c.b16 %v2054, %v2048
  %v2199 = vpack.c.b16 %v2055, %v2049
  %v2200 = vpack.c.b16 %v2062, %v2056
  %v2201 = vpack.c.b16 %v2063, %v2057
  %v2202 = vpack.c.b16 %v2064, %v2058
  %v2203 = vpack.c.b16 %v2065, %v2059
  %v2204 = vpack.c.b16 %v2066, %v2060
  %v2205 = vpack.c.b16 %v2067, %v2061
  %v2206 = vpack.c.b16 %v2074, %v2068
  %v2207 = vpack.c.b16 %v2075, %v2069
  %v2208 = vpack.c.b16 %v2076, %v2070
  %v2209 = vpack.c.b16 %v2077, %v2071
  %v2210 = vpack.c.b16 %v2078, %v2072
  %v2211 = vpack.c.b16 %v2079, %v2073
  %v2212 = vpack.c.b16 %v2086, %v2080
  %v2213 = vpack.c.b16 %v2087, %v2081
  %v2214 = vpack.c.b16 %v2088, %v2082
  %v2215 = vpack.c.b16 %v2089, %v2083
  %v2216 = vpack.c.b16 %v2090, %v2084
  %v2217 = vpack.c.b16 %v2091, %v2085
  %v2218 = vpack.c.b16 %v2098, %v2092
  %v2219 = vpack.c.b16 %v2099, %v2093
  %v2220 = vpack.c.b16 %v2100, %v2094
  %v2221 = vpack.c.b16 %v2101, %v2095
  %v2222 = vpack.c.b16 %v2102, %v2096
  %v2223 = vpack.c.b16 %v2103, %v2097
  %v2224 = vpack.c.b16 %v2110, %v2104
  %v2225 = vpack.c.b16 %v2111, %v2105
  %v2226 = vpack.c.b16 %v2112, %v2106
  %v2227 = vpack.c.b16 %v2113, %v2107
  %v2228 = vpack.c.b16 %v2114, %v2108
  %v2229 = vpack.c.b16 %v2115, %v2109
  %v2230 = vpack.c.b16 %v2122, %v2116
  %v2231 = vpack.c.b16 %v2123, %v2117
  %v2232 = vpack.c.b16 %v2124, %v2118
  %v2233 = vpack.c.b16 %v2125, %v2119
  %v2234 = vpack.c.b16 %v2126, %v2120
  %v2235 = vpack.c.b16 %v2127, %v2121
  %v2236 = vpack.c.b16 %v2134, %v2128
  %v2237 = vpack.c.b16 %v2135, %v2129
  %v2238 = vpack.c.b16 %v2136, %v2130
  %v2239 = vpack.c.b16 %v2137, %v2131
  %v2240 = vpack.c.b16 %v2138, %v2132
  %v2241 = vpack.c.b16 %v2139, %v2133
  %v2242 = vpack.c.b16 %v2146, %v2140
  %v2243 = vpack.c.b16 %v2147, %v2141
  %v2244 = vpack.c.b16 %v2148, %v2142
  %v2245 = vpack.c.b16 %v2149, %v2143
  %v2246 = vpack.c.b16 %v2150, %v2144
  %v2247 = vpack.c.b16 %v2151, %v2145
  %2344 = vmatprep.subr.bf16.mxu0 %v2195
  %2345 = vmatpush1.bf16.msra.mxu0 %v2194
  %2346 = vmatprep.subr.bf16.mxu0 %v2189
  %2347 = vmatpush1.bf16.msra.mxu0 %v2188
  %2348 = vmatprep.subr.bf16.mxu0 %v2183
  %2349 = vmatpush1.bf16.msra.mxu0 %v2182
  %2350 = vmatprep.subr.bf16.mxu0 %v2177
  %2351 = vmatpush1.bf16.msra.mxu0 %v2176
  %2352 = vmatprep.subr.bf16.mxu0 %v2171
  %2353 = vmatpush1.bf16.msra.mxu0 %v2170
  %2354 = vmatprep.subr.bf16.mxu0 %v2165
  %2355 = vmatpush1.bf16.msra.mxu0 %v2164
  %2356 = vmatprep.subr.bf16.mxu0 %v2159
  %2357 = vmatpush1.bf16.msra.mxu0 %v2158
  %2358 = vmatprep.subr.bf16.mxu0 %v2153
  %2359 = vmatpush1.bf16.msra.mxu0 %v2152
  %2360 = vmatprep.subr.bf16.mxu0 %v2243
  %2361 = vmatpush2.bf16.msra.mxu0 %v2242
  %2362 = vmatprep.subr.bf16.mxu0 %v2237
  %2363 = vmatpush2.bf16.msra.mxu0 %v2236
  %2364 = vmatprep.subr.bf16.mxu0 %v2231
  %2365 = vmatpush2.bf16.msra.mxu0 %v2230
  %2366 = vmatprep.subr.bf16.mxu0 %v2225
  %2367 = vmatpush2.bf16.msra.mxu0 %v2224
  %2368 = vmatprep.subr.bf16.mxu0 %v2219
  %2369 = vmatpush2.bf16.msra.mxu0 %v2218
  %2370 = vmatprep.subr.bf16.mxu0 %v2213
  %2371 = vmatpush2.bf16.msra.mxu0 %v2212
  %2372 = vmatprep.subr.bf16.mxu0 %v2207
  %2373 = vmatpush2.bf16.msra.mxu0 %v2206
  %2374 = vmatprep.subr.bf16.mxu0 %v2201
  %2375 = vmatpush2.bf16.msra.mxu0 %v2200
  %2376 = vmatprep.mubr.bf16.mxu0 %v1735
  %2377 = vmatmul.mubr.bf16.gmra.mxu0 %v1734
  %v2378 = vpop.f32.mrf.mxu0
  %v2379 = vadd.f32 %v1837, %v2378
  %v2380 = vpop.f32.mrf.mxu0
  %v2381 = vadd.f32 %v1841, %v2380
  %v2382 = vpop.f32.mrf.mxu0
  %v2383 = vadd.f32 %v1837, %v2382
  %v2384 = vpop.f32.mrf.mxu0
  %v2385 = vadd.f32 %v1841, %v2384
  %2386 = vdwg.mxu0
  %2387 = vmatprep.subr.bf16.mxu0 %v2197
  %2388 = vmatpush1.bf16.msra.mxu0 %v2196
  %2389 = vmatprep.subr.bf16.mxu0 %v2191
  %2390 = vmatpush1.bf16.msra.mxu0 %v2190
  %2391 = vmatprep.subr.bf16.mxu0 %v2185
  %2392 = vmatpush1.bf16.msra.mxu0 %v2184
  %2393 = vmatprep.subr.bf16.mxu0 %v2179
  %2394 = vmatpush1.bf16.msra.mxu0 %v2178
  %2395 = vmatprep.subr.bf16.mxu0 %v2173
  %2396 = vmatpush1.bf16.msra.mxu0 %v2172
  %2397 = vmatprep.subr.bf16.mxu0 %v2167
  %2398 = vmatpush1.bf16.msra.mxu0 %v2166
  %2399 = vmatprep.subr.bf16.mxu0 %v2161
  %2400 = vmatpush1.bf16.msra.mxu0 %v2160
  %2401 = vmatprep.subr.bf16.mxu0 %v2155
  %2402 = vmatpush1.bf16.msra.mxu0 %v2154
  %2403 = vmatprep.subr.bf16.mxu0 %v2245
  %2404 = vmatpush2.bf16.msra.mxu0 %v2244
  %2405 = vmatprep.subr.bf16.mxu0 %v2239
  %2406 = vmatpush2.bf16.msra.mxu0 %v2238
  %2407 = vmatprep.subr.bf16.mxu0 %v2233
  %2408 = vmatpush2.bf16.msra.mxu0 %v2232
  %2409 = vmatprep.subr.bf16.mxu0 %v2227
  %2410 = vmatpush2.bf16.msra.mxu0 %v2226
  %2411 = vmatprep.subr.bf16.mxu0 %v2221
  %2412 = vmatpush2.bf16.msra.mxu0 %v2220
  %2413 = vmatprep.subr.bf16.mxu0 %v2215
  %2414 = vmatpush2.bf16.msra.mxu0 %v2214
  %2415 = vmatprep.subr.bf16.mxu0 %v2209
  %2416 = vmatpush2.bf16.msra.mxu0 %v2208
  %2417 = vmatprep.subr.bf16.mxu0 %v2203
  %2418 = vmatpush2.bf16.msra.mxu0 %v2202
  %2419 = vmatprep.mubr.bf16.mxu0 %v1735
  %2420 = vmatmul.mubr.bf16.gmra.mxu0 %v1734
  %v2421 = vpop.f32.mrf.mxu0
  %v2422 = vadd.f32 %v1845, %v2421
  %v2423 = vpop.f32.mrf.mxu0
  %v2424 = vadd.f32 %v1849, %v2423
  %v2425 = vpop.f32.mrf.mxu0
  %v2426 = vadd.f32 %v1845, %v2425
  %v2427 = vpop.f32.mrf.mxu0
  %v2428 = vadd.f32 %v1849, %v2427
  %2429 = vdwg.mxu0
  %2430 = vmatprep.subr.bf16.mxu0 %v2199
  %2431 = vmatpush1.bf16.msra.mxu0 %v2198
  %2432 = vmatprep.subr.bf16.mxu0 %v2193
  %2433 = vmatpush1.bf16.msra.mxu0 %v2192
  %2434 = vmatprep.subr.bf16.mxu0 %v2187
  %2435 = vmatpush1.bf16.msra.mxu0 %v2186
  %2436 = vmatprep.subr.bf16.mxu0 %v2181
  %2437 = vmatpush1.bf16.msra.mxu0 %v2180
  %2438 = vmatprep.subr.bf16.mxu0 %v2175
  %2439 = vmatpush1.bf16.msra.mxu0 %v2174
  %2440 = vmatprep.subr.bf16.mxu0 %v2169
  %2441 = vmatpush1.bf16.msra.mxu0 %v2168
  %2442 = vmatprep.subr.bf16.mxu0 %v2163
  %2443 = vmatpush1.bf16.msra.mxu0 %v2162
  %2444 = vmatprep.subr.bf16.mxu0 %v2157
  %2445 = vmatpush1.bf16.msra.mxu0 %v2156
  %2446 = vmatprep.subr.bf16.mxu0 %v2247
  %2447 = vmatpush2.bf16.msra.mxu0 %v2246
  %2448 = vmatprep.subr.bf16.mxu0 %v2241
  %2449 = vmatpush2.bf16.msra.mxu0 %v2240
  %2450 = vmatprep.subr.bf16.mxu0 %v2235
  %2451 = vmatpush2.bf16.msra.mxu0 %v2234
  %2452 = vmatprep.subr.bf16.mxu0 %v2229
  %2453 = vmatpush2.bf16.msra.mxu0 %v2228
  %2454 = vmatprep.subr.bf16.mxu0 %v2223
  %2455 = vmatpush2.bf16.msra.mxu0 %v2222
  %2456 = vmatprep.subr.bf16.mxu0 %v2217
  %2457 = vmatpush2.bf16.msra.mxu0 %v2216
  %2458 = vmatprep.subr.bf16.mxu0 %v2211
  %2459 = vmatpush2.bf16.msra.mxu0 %v2210
  %2460 = vmatprep.subr.bf16.mxu0 %v2205
  %2461 = vmatpush2.bf16.msra.mxu0 %v2204
  %2462 = vmatprep.mubr.bf16.mxu0 %v1735
  %2463 = vmatmul.mubr.bf16.gmra.mxu0 %v1734
  %v2464 = vpop.f32.mrf.mxu0
  %v2465 = vadd.f32 %v1853, %v2464
  %v2466 = vpop.f32.mrf.mxu0
  %v2467 = vadd.f32 %v1857, %v2466
  %v2468 = vpop.f32.mrf.mxu0
  %v2469 = vadd.f32 %v1853, %v2468
  %v2470 = vpop.f32.mrf.mxu0
  %v2471 = vadd.f32 %v1857, %v2470
  %2472 = vdwg.mxu0
  %v2473 = vxor.u32 %v2379, 2147483648
  %v2474 = vxor.u32 %v2381, 2147483648
  %v2475 = vxor.u32 %v2422, 2147483648
  %v2476 = vxor.u32 %v2424, 2147483648
  %v2477 = vxor.u32 %v2465, 2147483648
  %v2478 = vxor.u32 %v2467, 2147483648
  %v2479 = vxor.u32 %v2383, 2147483648
  %v2480 = vxor.u32 %v2385, 2147483648
  %v2481 = vxor.u32 %v2426, 2147483648
  %v2482 = vxor.u32 %v2428, 2147483648
  %v2483 = vxor.u32 %v2469, 2147483648
  %v2484 = vxor.u32 %v2471, 2147483648
  %v2485 = vmul.f32 %v2473, 1.442695
  %v2486 = vpow.pop %v2485
  %v2487 = vmul.f32 %v2474, 1.442695
  %v2488 = vpow.pop %v2487
  %v2489 = vmul.f32 %v2475, 1.442695
  %v2490 = vpow.pop %v2489
  %v2491 = vmul.f32 %v2476, 1.442695
  %v2492 = vpow.pop %v2491
  %v2493 = vmul.f32 %v2477, 1.442695
  %v2494 = vpow.pop %v2493
  %v2495 = vmul.f32 %v2478, 1.442695
  %v2496 = vpow.pop %v2495
  %v2497 = vmul.f32 %v2479, 1.442695
  %v2498 = vpow.pop %v2497
  %v2499 = vmul.f32 %v2480, 1.442695
  %v2500 = vpow.pop %v2499
  %v2501 = vmul.f32 %v2481, 1.442695
  %v2502 = vpow.pop %v2501
  %v2503 = vmul.f32 %v2482, 1.442695
  %v2504 = vpow.pop %v2503
  %v2505 = vmul.f32 %v2483, 1.442695
  %v2506 = vpow.pop %v2505
  %v2507 = vmul.f32 %v2484, 1.442695
  %v2508 = vpow.pop %v2507
  %v2509 = vadd.f32 %v2486, 1.0
  %v2510 = vadd.f32 %v2488, 1.0
  %v2511 = vadd.f32 %v2490, 1.0
  %v2512 = vadd.f32 %v2492, 1.0
  %v2513 = vadd.f32 %v2494, 1.0
  %v2514 = vadd.f32 %v2496, 1.0
  %v2515 = vadd.f32 %v2498, 1.0
  %v2516 = vadd.f32 %v2500, 1.0
  %v2517 = vadd.f32 %v2502, 1.0
  %v2518 = vadd.f32 %v2504, 1.0
  %v2519 = vadd.f32 %v2506, 1.0
  %v2520 = vadd.f32 %v2508, 1.0
  %v2521 = vrcp.pop %v2509
  %v2522 = vmul.f32 1.0, %v2521
  %v2523 = vrcp.pop %v2510
  %v2524 = vmul.f32 1.0, %v2523
  %v2525 = vrcp.pop %v2511
  %v2526 = vmul.f32 1.0, %v2525
  %v2527 = vrcp.pop %v2512
  %v2528 = vmul.f32 1.0, %v2527
  %v2529 = vrcp.pop %v2513
  %v2530 = vmul.f32 1.0, %v2529
  %v2531 = vrcp.pop %v2514
  %v2532 = vmul.f32 1.0, %v2531
  %v2533 = vrcp.pop %v2515
  %v2534 = vmul.f32 1.0, %v2533
  %v2535 = vrcp.pop %v2516
  %v2536 = vmul.f32 1.0, %v2535
  %v2537 = vrcp.pop %v2517
  %v2538 = vmul.f32 1.0, %v2537
  %v2539 = vrcp.pop %v2518
  %v2540 = vmul.f32 1.0, %v2539
  %v2541 = vrcp.pop %v2519
  %v2542 = vmul.f32 1.0, %v2541
  %v2543 = vrcp.pop %v2520
  %v2544 = vmul.f32 1.0, %v2543
  %v2545 = vpack.c.bf16 %v2534, %v2522
  %v2546 = vpack.c.bf16 %v2536, %v2524
  %v2547 = vpack.c.bf16 %v2538, %v2526
  %v2548 = vpack.c.bf16 %v2540, %v2528
  %v2549 = vpack.c.bf16 %v2542, %v2530
  %v2550 = vpack.c.bf16 %v2544, %v2532
  %v2557 = vunpack.c.l.b16 %v2545
  %v2558 = vunpack.c.l.b16 %v2546
  %v2559 = vunpack.c.l.b16 %v2547
  %v2560 = vunpack.c.l.b16 %v2548
  %v2561 = vunpack.c.l.b16 %v2549
  %v2562 = vunpack.c.l.b16 %v2550
  %v2563 = vunpack.c.h.b16 %v2545
  %v2564 = vunpack.c.h.b16 %v2546
  %v2565 = vunpack.c.h.b16 %v2547
  %v2566 = vunpack.c.h.b16 %v2548
  %v2567 = vunpack.c.h.b16 %v2549
  %v2568 = vunpack.c.h.b16 %v2550
  %v2569 = vpack.c.b16 %v2558, %v2557
  %v2570 = vpack.c.b16 %v2560, %v2559
  %v2571 = vpack.c.b16 %v2562, %v2561
  %v2572 = vpack.c.b16 %v2564, %v2563
  %v2573 = vpack.c.b16 %v2566, %v2565
  %v2574 = vpack.c.b16 %v2568, %v2567
  %2581 = vst [vmem:[%s14] sm:$0xff] %v2569
  %2582 = vst [vmem:[%s14 + $0x8] sm:$0xff] %v2570
  %2583 = vst [vmem:[%s14 + $0x10] sm:$0xff] %v2571
  %2584 = vst [vmem:[%s14 + $0x18] sm:$0xff] %v2572
  %2585 = vst [vmem:[%s14 + $0x20] sm:$0xff] %v2573
  %2586 = vst [vmem:[%s14 + $0x28] sm:$0xff] %v2574
  // Predicated region
  $region58: #{jigsaw_vae_forward.1} parent=0 // pred_check
    _
  $region59: #{jigsaw_vae_forward.1} parent=0 // pred_check_branch
    %2588 = sbr.rel (0) target = $region61
  $region60: #{jigsaw_vae_forward.1} parent=0 // pred_region
    _
  $region61: #{jigsaw_vae_forward.1} parent=0 // pred_fallthru
    _
  // Predicated region
  $region62: #{jigsaw_vae_forward.1} parent=0 // pred_check
    _
  $region63: #{jigsaw_vae_forward.1} parent=0 // pred_check_branch
    %2590 = sbr.rel (0) target = $region65
  $region64: #{jigsaw_vae_forward.1} parent=0 // pred_region
    _
  $region65: #{jigsaw_vae_forward.1} parent=0 // pred_fallthru
    _
  // Predicated region
  $region66: #{jigsaw_vae_forward.1} parent=0 // pred_check
    _
  $region67: #{jigsaw_vae_forward.1} parent=0 // pred_check_branch
    %2592 = sbr.rel (0) target = $region69
  $region68: #{jigsaw_vae_forward.1} parent=0 // pred_region
    _
  $region69: #{jigsaw_vae_forward.1} parent=0 // pred_fallthru
    _
  // Predicated region
  $region70: #{jigsaw_vae_forward.1} parent=0 // pred_check
    _
  $region71: #{jigsaw_vae_forward.1} parent=0 // pred_check_branch
    %2594 = sbr.rel (0) target = $region73
  $region72: #{jigsaw_vae_forward.1} parent=0 // pred_region
    _
  $region73: #{jigsaw_vae_forward.1} parent=0 // pred_fallthru
    _

</llo_original>
